<compile_context>
chip_gen: v5e
topology: v5e:2x2
jax: 0.10.0
libtpu: 0.0.40
codegen_flags: <defaults>
</compile_context>

<pallas_src>
import jax
import jax.numpy as jnp
from jax import lax
from jax.experimental import pallas as pl
from jax.experimental.pallas import tpu as pltpu

LANE = 128


def _round_up(x, m):
    return (x + m - 1) // m * m


def _conv_bn_relu6_kernel(x_ref, w_ref, scale_ref, bias_ref, o_ref):
    # x_ref:     (1, 1, TH+2, W+2, Cin_p)  bf16 halo'd input slab for this tile
    # w_ref:     (3, 3*Cin_p, TC)          bf16, w[kh, kw*Cin_p + ci, co]
    # scale_ref: (1, TC) f32  folded BN scale = gamma / sqrt(var + eps)
    # bias_ref:  (1, TC) f32  folded BN bias  = beta - mean * scale
    # o_ref:     (1, TH, W_out, TC)
    th, w_out, tc = o_ref.shape[1], o_ref.shape[2], o_ref.shape[3]
    k3 = w_ref.shape[1]                      # 3 * Cin_p

    x = x_ref[0, 0]                          # (TH+2, W+2, Cin_p)

    # im2col along W: concatenate the three kw-shifted windows on the lane
    # (channel) axis -> (TH+2, W_out, 3*Cin_p); flatten the rows once.
    cols = jnp.concatenate([x[:, kw:kw + w_out, :] for kw in range(3)], axis=-1)
    cols = cols.reshape((th + 2) * w_out, k3)

    # 3 fat MXU matmuls (one per kh), K = 3*Cin_p, f32 accumulation.
    acc = jnp.zeros((th * w_out, tc), jnp.float32)
    for kh in range(3):
        a = cols[kh * w_out:(kh + th) * w_out]   # leading-dim slice (cheap)
        acc = acc + jnp.dot(a, w_ref[kh], preferred_element_type=jnp.float32)

    y = acc * scale_ref[0] + bias_ref[0]     # folded eval-mode BatchNorm
    y = jnp.clip(y, 0.0, 6.0)                # ReLU6
    o_ref[0] = y.reshape(th, w_out, tc).astype(o_ref.dtype)


def conv3x3_bn_relu6(x_nchw, w_oihw, gamma, beta, running_mean, running_var,
                     *, stride=1, eps=1e-5, block_rows=128, block_cout=LANE):
    """3x3 conv (pad=1, no bias) + eval-mode BN + ReLU6.  NCHW in/out."""
    if stride != 1:
        # TODO(synk): stride > 1 would need strided window gathers (expensive
        # sublane strides); only the stride=1 fast path is implemented.
        raise NotImplementedError("Pallas Conv3x3BNReLU6 supports stride=1 only")

    N, Cin, H, W = x_nchw.shape
    Cout = w_oihw.shape[0]
    H_out, W_out = H, W                      # k=3, stride=1, pad=1

    Cin_p = _round_up(Cin, LANE)
    Cout_p = _round_up(Cout, LANE)
    tc = min(block_cout, Cout_p)
    assert Cout_p % tc == 0

    # H tile so the matmul M-dim (TH * W_out) is ~block_rows and divides H_out.
    th = max(1, min(H_out, block_rows // max(1, W_out)))
    while H_out % th:
        th -= 1
    n_ht = H_out // th

    # NCHW -> NHWC, spatial pad 1, channel pad to a lane multiple, bf16.
    x = jnp.transpose(x_nchw, (0, 2, 3, 1))
    x = jnp.pad(x, ((0, 0), (1, 1), (1, 1), (0, Cin_p - Cin)))
    x = x.astype(jnp.bfloat16)

    # Materialize the overlapping H halo slabs in the wrapper:
    # x_tiles[n, t, r] = x_padded[n, t*TH + r],  r in [0, TH+2).
    row_idx = jnp.arange(n_ht)[:, None] * th + jnp.arange(th + 2)[None, :]
    x_tiles = x[:, row_idx]                  # (N, n_ht, TH+2, W+2, Cin_p)

    # OIHW -> [kh, kw*Cin_p + ci, co], channel-padded, bf16.
    w_hwio = jnp.transpose(w_oihw, (2, 3, 1, 0))
    w_hwio = jnp.pad(w_hwio, ((0, 0), (0, 0), (0, Cin_p - Cin), (0, Cout_p - Cout)))
    w_folded = w_hwio.reshape(3, 3 * Cin_p, Cout_p).astype(jnp.bfloat16)

    # Folded eval-mode BatchNorm constants (f32 epilogue).
    inv_std = 1.0 / jnp.sqrt(running_var.astype(jnp.float32) + eps)
    scale = gamma.astype(jnp.float32) * inv_std
    bias = beta.astype(jnp.float32) - running_mean.astype(jnp.float32) * scale
    scale = jnp.pad(scale, (0, Cout_p - Cout)).reshape(1, Cout_p)
    bias = jnp.pad(bias, (0, Cout_p - Cout)).reshape(1, Cout_p)

    grid = (N, n_ht, Cout_p // tc)
    out_nhwc = pl.pallas_call(
        _conv_bn_relu6_kernel,
        out_shape=jax.ShapeDtypeStruct((N, H_out, W_out, Cout_p), x_nchw.dtype),
        grid=grid,
        in_specs=[
            pl.BlockSpec((1, 1, th + 2, W + 2, Cin_p),
                         lambda n, h, c: (n, h, 0, 0, 0)),
            pl.BlockSpec((3, 3 * Cin_p, tc), lambda n, h, c: (0, 0, c)),
            pl.BlockSpec((1, tc), lambda n, h, c: (0, c)),
            pl.BlockSpec((1, tc), lambda n, h, c: (0, c)),
        ],
        out_specs=pl.BlockSpec((1, th, W_out, tc), lambda n, h, c: (n, h, 0, c)),
        compiler_params=pltpu.CompilerParams(
            dimension_semantics=("parallel", "parallel", "parallel")),
    )(x_tiles, w_folded, scale, bias)

    # Drop channel padding, back to NCHW.
    return jnp.transpose(out_nhwc[..., :Cout], (0, 3, 1, 2))


def _reference(x_nchw, w_oihw, gamma, beta, mean, var, *, eps=1e-5,
               quantize_bf16=False):
    x, w = x_nchw, w_oihw
    if quantize_bf16:   # mimic the kernel's bf16 operand quantization
        x = x.astype(jnp.bfloat16).astype(jnp.float32)
        w = w.astype(jnp.bfloat16).astype(jnp.float32)
    y = lax.conv_general_dilated(
        x, w, window_strides=(1, 1), padding=((1, 1), (1, 1)),
        dimension_numbers=("NCHW", "OIHW", "NCHW"))
    inv_std = 1.0 / jnp.sqrt(var + eps)
    scale = (gamma * inv_std).reshape(1, -1, 1, 1)
    bias = (beta - mean * gamma * inv_std).reshape(1, -1, 1, 1)
    return jnp.clip(y * scale + bias, 0.0, 6.0)


if __name__ == "__main__":
    key = jax.random.PRNGKey(0)
    k_x, k_w, k_g, k_b, k_m, k_v = jax.random.split(key, 6)

    N, Cin, H, W = 2, 4, 16, 16
    Cout = 8

    x = jax.random.normal(k_x, (N, Cin, H, W), dtype=jnp.float32)
    w = jax.random.normal(k_w, (Cout, Cin, 3, 3), dtype=jnp.float32) * 0.1
    gamma = 1.0 + 0.1 * jax.random.normal(k_g, (Cout,), dtype=jnp.float32)
    beta = 0.1 * jax.random.normal(k_b, (Cout,), dtype=jnp.float32)
    running_mean = 0.1 * jax.random.normal(k_m, (Cout,), dtype=jnp.float32)
    running_var = jax.random.uniform(k_v, (Cout,), minval=0.5, maxval=1.5,
                                     dtype=jnp.float32)

    out = conv3x3_bn_relu6(x, w, gamma, beta, running_mean, running_var)
    out = jax.block_until_ready(out)
    assert out.shape == (N, Cout, H, W), out.shape

    # Tight check vs a reference with identical bf16 operand quantization.
    ref_q = _reference(x, w, gamma, beta, running_mean, running_var,
                       quantize_bf16=True)
    err_q = float(jnp.max(jnp.abs(out - ref_q)))
    assert err_q < 2e-3, err_q

    # Loose sanity check vs the full-f32 reference (bf16 operand rounding).
    ref = _reference(x, w, gamma, beta, running_mean, running_var)
    err = float(jnp.max(jnp.abs(out - ref)))
    assert err < 1e-1, err

    print("KERNEL_OK")
</pallas_src>

<mosaic_0001>
module attributes {stable_mosaic.version = 11 : i64} {
  func.func @_conv_bn_relu6_kernel(%arg0: i32, %arg1: i32, %arg2: i32, %arg3: memref<1x1x10x18x128xbf16, #tpu.memory_space<vmem>>, %arg4: memref<3x384x128xbf16, #tpu.memory_space<vmem>>, %arg5: memref<1x128xf32, #tpu.memory_space<vmem>>, %arg6: memref<1x128xf32, #tpu.memory_space<vmem>>, %arg7: memref<1x8x16x128xf32, #tpu.memory_space<vmem>>) attributes {dimension_semantics = [#tpu.dimension_semantics<parallel>, #tpu.dimension_semantics<parallel>, #tpu.dimension_semantics<parallel>], iteration_bounds = array<i64: 2, 2, 1>, scalar_prefetch = 0 : i64, scratch_operands = 0 : i64, tpu.core_type = #tpu.core_type<tc>, window_params = [{transform_indices = @transform_0, window_bounds = array<i64: 1, 1, 10, 18, 128>}, {transform_indices = @transform_1, window_bounds = array<i64: 3, 384, 128>}, {transform_indices = @transform_2, window_bounds = array<i64: 1, 128>}, {transform_indices = @transform_3, window_bounds = array<i64: 1, 128>}, {transform_indices = @transform_4, window_bounds = array<i64: 1, 8, 16, 128>}]} {
    %c0 = arith.constant 0 : index
    %c0_0 = arith.constant 0 : index
    %c0_1 = arith.constant 0 : index
    %c0_2 = arith.constant 0 : index
    %c0_3 = arith.constant 0 : index
    %0 = vector.load %arg3[%c0, %c0_0, %c0_1, %c0_2, %c0_3] : memref<1x1x10x18x128xbf16, #tpu.memory_space<vmem>>, vector<1x1x10x18x128xbf16>
    %1 = vector.shape_cast %0 : vector<1x1x10x18x128xbf16> to vector<10x18x128xbf16>
    %2 = vector.extract_strided_slice %1 {offsets = [0, 0, 0], sizes = [10, 16, 128], strides = [1, 1, 1]} : vector<10x18x128xbf16> to vector<10x16x128xbf16>
    %3 = vector.extract_strided_slice %1 {offsets = [0, 1, 0], sizes = [10, 16, 128], strides = [1, 1, 1]} : vector<10x18x128xbf16> to vector<10x16x128xbf16>
    %4 = vector.extract_strided_slice %1 {offsets = [0, 2, 0], sizes = [10, 16, 128], strides = [1, 1, 1]} : vector<10x18x128xbf16> to vector<10x16x128xbf16>
    %5 = tpu.concatenate %2, %3, %4 in 2 : vector<10x16x128xbf16>, vector<10x16x128xbf16>, vector<10x16x128xbf16> -> vector<10x16x384xbf16>
    %6 = vector.shape_cast %5 : vector<10x16x384xbf16> to vector<160x384xbf16>
    %cst = arith.constant 0.000000e+00 : f32
    %7 = vector.broadcast %cst : f32 to vector<128x128xf32>
    %8 = vector.extract_strided_slice %6 {offsets = [0, 0], sizes = [128, 384], strides = [1, 1]} : vector<160x384xbf16> to vector<128x384xbf16>
    %c0_4 = arith.constant 0 : index
    %c0_5 = arith.constant 0 : index
    %c0_6 = arith.constant 0 : index
    %9 = vector.load %arg4[%c0_4, %c0_5, %c0_6] : memref<3x384x128xbf16, #tpu.memory_space<vmem>>, vector<1x384x128xbf16>
    %10 = vector.shape_cast %9 : vector<1x384x128xbf16> to vector<384x128xbf16>
    %cst_7 = arith.constant dense<0.000000e+00> : vector<128x128xf32>
    %11 = tpu.matmul %8, %10, %cst_7 {dimension_numbers = #tpu.dot_dimension_numbers<[1], [0], [0], [1], [0, 0, 1, 1], [], []>} : vector<128x384xbf16>, vector<384x128xbf16>, vector<128x128xf32> -> vector<128x128xf32>
    %12 = arith.addf %7, %11 : vector<128x128xf32>
    %13 = vector.extract_strided_slice %6 {offsets = [16, 0], sizes = [128, 384], strides = [1, 1]} : vector<160x384xbf16> to vector<128x384xbf16>
    %c1 = arith.constant 1 : index
    %c0_8 = arith.constant 0 : index
    %c0_9 = arith.constant 0 : index
    %14 = vector.load %arg4[%c1, %c0_8, %c0_9] : memref<3x384x128xbf16, #tpu.memory_space<vmem>>, vector<1x384x128xbf16>
    %15 = vector.shape_cast %14 : vector<1x384x128xbf16> to vector<384x128xbf16>
    %cst_10 = arith.constant dense<0.000000e+00> : vector<128x128xf32>
    %16 = tpu.matmul %13, %15, %cst_10 {dimension_numbers = #tpu.dot_dimension_numbers<[1], [0], [0], [1], [0, 0, 1, 1], [], []>} : vector<128x384xbf16>, vector<384x128xbf16>, vector<128x128xf32> -> vector<128x128xf32>
    %17 = arith.addf %12, %16 : vector<128x128xf32>
    %18 = vector.extract_strided_slice %6 {offsets = [32, 0], sizes = [128, 384], strides = [1, 1]} : vector<160x384xbf16> to vector<128x384xbf16>
    %c2 = arith.constant 2 : index
    %c0_11 = arith.constant 0 : index
    %c0_12 = arith.constant 0 : index
    %19 = vector.load %arg4[%c2, %c0_11, %c0_12] : memref<3x384x128xbf16, #tpu.memory_space<vmem>>, vector<1x384x128xbf16>
    %20 = vector.shape_cast %19 : vector<1x384x128xbf16> to vector<384x128xbf16>
    %cst_13 = arith.constant dense<0.000000e+00> : vector<128x128xf32>
    %21 = tpu.matmul %18, %20, %cst_13 {dimension_numbers = #tpu.dot_dimension_numbers<[1], [0], [0], [1], [0, 0, 1, 1], [], []>} : vector<128x384xbf16>, vector<384x128xbf16>, vector<128x128xf32> -> vector<128x128xf32>
    %22 = arith.addf %17, %21 : vector<128x128xf32>
    %c0_14 = arith.constant 0 : index
    %c0_15 = arith.constant 0 : index
    %23 = vector.load %arg5[%c0_14, %c0_15] : memref<1x128xf32, #tpu.memory_space<vmem>>, vector<1x128xf32>
    %24 = vector.shape_cast %23 : vector<1x128xf32> to vector<128xf32>
    %25 = vector.shape_cast %24 : vector<128xf32> to vector<1x128xf32>
    %26 = vector.broadcast %25 : vector<1x128xf32> to vector<128x128xf32>
    %27 = arith.mulf %22, %26 : vector<128x128xf32>
    %c0_16 = arith.constant 0 : index
    %c0_17 = arith.constant 0 : index
    %28 = vector.load %arg6[%c0_16, %c0_17] : memref<1x128xf32, #tpu.memory_space<vmem>>, vector<1x128xf32>
    %29 = vector.shape_cast %28 : vector<1x128xf32> to vector<128xf32>
    %30 = vector.shape_cast %29 : vector<128xf32> to vector<1x128xf32>
    %31 = vector.broadcast %30 : vector<1x128xf32> to vector<128x128xf32>
    %32 = arith.addf %27, %31 : vector<128x128xf32>
    %cst_18 = arith.constant 0.000000e+00 : f32
    %cst_19 = arith.constant 6.000000e+00 : f32
    %33 = vector.broadcast %cst_18 : f32 to vector<128x128xf32>
    %34 = arith.maximumf %33, %32 : vector<128x128xf32>
    %35 = vector.broadcast %cst_19 : f32 to vector<128x128xf32>
    %36 = arith.minimumf %35, %34 : vector<128x128xf32>
    %37 = vector.shape_cast %36 : vector<128x128xf32> to vector<8x16x128xf32>
    %c0_20 = arith.constant 0 : index
    %c0_21 = arith.constant 0 : index
    %c0_22 = arith.constant 0 : index
    %c0_23 = arith.constant 0 : index
    %38 = vector.load %arg7[%c0_20, %c0_21, %c0_22, %c0_23] : memref<1x8x16x128xf32, #tpu.memory_space<vmem>>, vector<1x8x16x128xf32>
    %39 = vector.shape_cast %38 : vector<1x8x16x128xf32> to vector<8x16x128xf32>
    %40 = vector.shape_cast %37 : vector<8x16x128xf32> to vector<1x8x16x128xf32>
    tpu.vector_store %arg7[%c0_20, %c0_21, %c0_22, %c0_23], %40 {strides = array<i32>} : memref<1x8x16x128xf32, #tpu.memory_space<vmem>>, vector<1x8x16x128xf32>,
    return
  }
  func.func @transform_0(%arg0: i32, %arg1: i32, %arg2: i32) -> (i32, i32, i32, i32, i32) {
    %c0_i32 = arith.constant 0 : i32
    %c0_i32_0 = arith.constant 0 : i32
    %c0_i32_1 = arith.constant 0 : i32
    %c0_i32_2 = arith.constant 0 : i32
    return %arg0, %arg1, %c0_i32, %c0_i32_0, %c0_i32_1 : i32, i32, i32, i32, i32
  }
  func.func @transform_1(%arg0: i32, %arg1: i32, %arg2: i32) -> (i32, i32, i32) {
    %c0_i32 = arith.constant 0 : i32
    %c0_i32_0 = arith.constant 0 : i32
    %c0_i32_1 = arith.constant 0 : i32
    return %c0_i32, %c0_i32_0, %arg2 : i32, i32, i32
  }
  func.func @transform_2(%arg0: i32, %arg1: i32, %arg2: i32) -> (i32, i32) {
    %c0_i32 = arith.constant 0 : i32
    %c0_i32_0 = arith.constant 0 : i32
    return %c0_i32, %arg2 : i32, i32
  }
  func.func @transform_3(%arg0: i32, %arg1: i32, %arg2: i32) -> (i32, i32) {
    %c0_i32 = arith.constant 0 : i32
    %c0_i32_0 = arith.constant 0 : i32
    return %c0_i32, %arg2 : i32, i32
  }
  func.func @transform_4(%arg0: i32, %arg1: i32, %arg2: i32) -> (i32, i32, i32, i32) {
    %c0_i32 = arith.constant 0 : i32
    %c0_i32_0 = arith.constant 0 : i32
    return %arg0, %arg1, %c0_i32, %arg2 : i32, i32, i32, i32
  }
}

</mosaic_0001>

<llo_original>
// kernel: tpu_custom_call.1
$region0: #{tpu_custom_call.1}
  #allocation0 [shape = 'u32[]', space=smem, size = 0x4, offset = 0x4, fixed_abs, tag = 'smem constant byte address 0x4 - core index']
  #allocation1 [shape = 'u32[72,128]{1,0:T(1,128)}', space=vmem, size = 0x9000, scoped, tag = 'internal scratch']
  %s0 = inlined_call_operand.vmem [shape: bf16[2,2,10,18,128], index: 0, kind: input, shape index: {}]
  %s1 = inlined_call_operand.vmem [shape: bf16[3,384,128], index: 1, kind: input, shape index: {}]
  %s2 = inlined_call_operand.vmem [shape: f32[1,128], index: 2, kind: input, shape index: {}]
  %s3 = inlined_call_operand.vmem [shape: f32[1,128], index: 3, kind: input, shape index: {}]
  %s4 = inlined_call_operand.hbm [shape: f32[2,16,16,128], index: 4, kind: output, shape index: {}]
  %s5 = sld [smem:[#allocation0]]
  $region49: #{tpu_custom_call.1} parent=0
    _
  %s7 = ssub.s32 1, %s5
  %s8 = scalar_select 0, %s7, %s5
  $region1: #{tpu_custom_call.1} parent=0
    #allocation2 [shape = 'u8[131072]{0}', space=vmem, size = 0x20000, scoped, tag = 'output window, operand 0']
    #allocation3 [shape = 's32[2]{0}', space=sflag, size = 0x8, scoped, tag = 'scoped memory for tpu_custom_call.1']
    %9 = vsyncpa [#allocation3], 0
    %s10 = scalar_lea.sflag [#allocation3], 1
    %11 = vsyncpa %s10, 0
    loop: start=0, step=1, limit=6
    $region2: #{tpu_custom_call.1} parent=1 // loop_pre_header
      _
    $region3: #{tpu_custom_call.1} parent=1 // loop_header
      %s13 = sphi 0, %s17
      %p14 = scmp.ge.s32.totalorder %s13, 6
      %s20 = sphi 0, %s39
      %s21 = sphi 0, %s35
      %s22 = sphi 0, %s31
      %s23 = sphi 0, %s20
      %s24 = sphi 0, %s21
      %s25 = sphi 0, %s22
      %s26 = sphi 0, %s23
      %s27 = sphi 0, %s24
      %s28 = sphi 0, %s25
      %s44 = sphi 0, %s46
      %s47 = sphi 0, %s44
      %s48 = sphi 0, %s47
      %s64 = sphi 0, %s48
      %s70 = sphi 0, %s72
      %s73 = sphi 0, %s70
      %s74 = sphi 0, %s73
      %s90 = sphi 0, %s74
      %s96 = sphi 0, %s98
      %s99 = sphi 0, %s96
      %s100 = sphi 0, %s99
      %s116 = sphi 0, %s100
      %s122 = sphi 0, %s124
      %s125 = sphi 0, %s122
      %s126 = sphi 0, %s125
      %s142 = sphi 0, %s126
      %s152 = sphi 0, %s154
      %s155 = sphi 0, %s152
      %s156 = sphi 0, %s155
      %s172 = sphi 0, %s156
    $region4: #{tpu_custom_call.1} parent=1 // loop_header_branch
      %16 = sbr.rel (%p14) target = $region8
    $region5: #{tpu_custom_call.1} parent=1 // loop_body
      %s18 = ssub.s32 %s13, 1
      %s19 = ssub.s32 %s13, 2
      %s29 = sadd.s32 1, %s22
      %p30 = scmp.ge.s32.totalorder %s29, 1
      %s31 = scalar_select %p30, 0, %s29
      %s32 = sadd.s32 1, %s21
      %s33 = scalar_select %p30, %s32, %s21
      %p34 = scmp.ge.s32.totalorder %s33, 2
      %s35 = scalar_select %p34, 0, %s33
      %s36 = sadd.s32 1, %s20
      %s37 = scalar_select %p34, %s36, %s20
      %p38 = scmp.ge.s32.totalorder %s37, 2
      %s39 = scalar_select %p38, 0, %s37
      %s40 = ssub.s32 %s20, %s39
      %s41 = ssub.s32 %s21, %s35
      %s42 = sor.u32 %s40, %s41
      %p43 = scmp.eq.s32.totalorder %s42, 0
      %s45 = sadd.s32 %s44, 1
      %s46 = scalar_select %p43, %s44, %s45
      %p49 = pneg %p43
      %p50 = scmp.eq.s32.totalorder %s13, 3
      %p51 = por %p49, %p50
      %p52 = scmp.ne.s32.totalorder %s44, %s47
      %p53 = scmp.eq.s32.totalorder %s13, 0
      %p54 = por %p52, %p53
      %p55 = scmp.ne.s32.totalorder %s44, %s47
      %p56 = scmp.eq.s32.totalorder %s18, 3
      %p57 = por %p55, %p56
      %p58 = scmp.ne.s32.totalorder %s47, %s48
      %p59 = scmp.eq.s32.totalorder %s18, 0
      %p60 = por %p58, %p59
      %p61 = scmp.ne.s32.totalorder %s47, %s48
      %p62 = scmp.eq.s32.totalorder %s19, 3
      %p63 = por %p61, %p62
      %p65 = scmp.ne.s32.totalorder %s48, %s64
      %p66 = scmp.eq.s32.totalorder %s19, 0
      %p67 = por %p65, %p66
      %s68 = ssub.s32 %s22, %s31
      %p69 = scmp.eq.s32.totalorder %s68, 0
      %s71 = sadd.s32 %s70, 1
      %s72 = scalar_select %p69, %s70, %s71
      %p75 = pneg %p69
      %p76 = scmp.eq.s32.totalorder %s13, 3
      %p77 = por %p75, %p76
      %p78 = scmp.ne.s32.totalorder %s70, %s73
      %p79 = scmp.eq.s32.totalorder %s13, 0
      %p80 = por %p78, %p79
      %p81 = scmp.ne.s32.totalorder %s70, %s73
      %p82 = scmp.eq.s32.totalorder %s18, 3
      %p83 = por %p81, %p82
      %p84 = scmp.ne.s32.totalorder %s73, %s74
      %p85 = scmp.eq.s32.totalorder %s18, 0
      %p86 = por %p84, %p85
      %p87 = scmp.ne.s32.totalorder %s73, %s74
      %p88 = scmp.eq.s32.totalorder %s19, 3
      %p89 = por %p87, %p88
      %p91 = scmp.ne.s32.totalorder %s74, %s90
      %p92 = scmp.eq.s32.totalorder %s19, 0
      %p93 = por %p91, %p92
      %s94 = ssub.s32 %s22, %s31
      %p95 = scmp.eq.s32.totalorder %s94, 0
      %s97 = sadd.s32 %s96, 1
      %s98 = scalar_select %p95, %s96, %s97
      %p101 = pneg %p95
      %p102 = scmp.eq.s32.totalorder %s13, 3
      %p103 = por %p101, %p102
      %p104 = scmp.ne.s32.totalorder %s96, %s99
      %p105 = scmp.eq.s32.totalorder %s13, 0
      %p106 = por %p104, %p105
      %p107 = scmp.ne.s32.totalorder %s96, %s99
      %p108 = scmp.eq.s32.totalorder %s18, 3
      %p109 = por %p107, %p108
      %p110 = scmp.ne.s32.totalorder %s99, %s100
      %p111 = scmp.eq.s32.totalorder %s18, 0
      %p112 = por %p110, %p111
      %p113 = scmp.ne.s32.totalorder %s99, %s100
      %p114 = scmp.eq.s32.totalorder %s19, 3
      %p115 = por %p113, %p114
      %p117 = scmp.ne.s32.totalorder %s100, %s116
      %p118 = scmp.eq.s32.totalorder %s19, 0
      %p119 = por %p117, %p118
      %s120 = ssub.s32 %s22, %s31
      %p121 = scmp.eq.s32.totalorder %s120, 0
      %s123 = sadd.s32 %s122, 1
      %s124 = scalar_select %p121, %s122, %s123
      %p127 = pneg %p121
      %p128 = scmp.eq.s32.totalorder %s13, 3
      %p129 = por %p127, %p128
      %p130 = scmp.ne.s32.totalorder %s122, %s125
      %p131 = scmp.eq.s32.totalorder %s13, 0
      %p132 = por %p130, %p131
      %p133 = scmp.ne.s32.totalorder %s122, %s125
      %p134 = scmp.eq.s32.totalorder %s18, 3
      %p135 = por %p133, %p134
      %p136 = scmp.ne.s32.totalorder %s125, %s126
      %p137 = scmp.eq.s32.totalorder %s18, 0
      %p138 = por %p136, %p137
      %p139 = scmp.ne.s32.totalorder %s125, %s126
      %p140 = scmp.eq.s32.totalorder %s19, 3
      %p141 = por %p139, %p140
      %p143 = scmp.ne.s32.totalorder %s126, %s142
      %p144 = scmp.eq.s32.totalorder %s19, 0
      %p145 = por %p143, %p144
      %s146 = ssub.s32 %s20, %s39
      %s147 = ssub.s32 %s21, %s35
      %s148 = sor.u32 %s146, %s147
      %s149 = ssub.s32 %s22, %s31
      %s150 = sor.u32 %s148, %s149
      %p151 = scmp.eq.s32.totalorder %s150, 0
      %s153 = sadd.s32 %s152, 1
      %s154 = scalar_select %p151, %s152, %s153
      %p157 = pneg %p151
      %p158 = scmp.eq.s32.totalorder %s13, 3
      %p159 = por %p157, %p158
      %p160 = scmp.ne.s32.totalorder %s152, %s155
      %p161 = scmp.eq.s32.totalorder %s13, 0
      %p162 = por %p160, %p161
      %p163 = scmp.ne.s32.totalorder %s152, %s155
      %p164 = scmp.eq.s32.totalorder %s18, 3
      %p165 = por %p163, %p164
      %p166 = scmp.ne.s32.totalorder %s155, %s156
      %p167 = scmp.eq.s32.totalorder %s18, 0
      %p168 = por %p166, %p167
      %p169 = scmp.ne.s32.totalorder %s155, %s156
      %p170 = scmp.eq.s32.totalorder %s19, 3
      %p171 = por %p169, %p170
      %p173 = scmp.ne.s32.totalorder %s156, %s172
      %p174 = scmp.eq.s32.totalorder %s19, 0
      %p175 = por %p173, %p174
      %p176 = scmp.le.s32.totalorder 1, %s13
      %p177 = scmp.lt.s32.totalorder %s13, 5
      %p178 = pnand %p176, %p177
      %p179 = pneg %p178
      // Predicated region
      $region9: #{tpu_custom_call.1} parent=5 // pred_check
        _
      $region10: #{tpu_custom_call.1} parent=5 // pred_check_branch
        %181 = sbr.rel (%p178) target = $region12
      $region11: #{tpu_custom_call.1} parent=5 // pred_region
        %s182 = ssub.s32 %s13, 1
        // Predicated region
        $region13: #{tpu_custom_call.1} parent=11 // pred_check
          %p183 = pneg %p86
        $region14: #{tpu_custom_call.1} parent=11 // pred_check_branch
          %185 = sbr.rel (%p183) target = $region16
        $region15: #{tpu_custom_call.1} parent=11 // pred_region
          %p186 = scmp.lt.s32.totalorder %s25, 0
          %s187 = scalar_select %p186, %s25, 0
          %s188 = smul.addr %s187, 4
          %s189 = scalar_lea.vmem %s1, %s188
        $region16: #{tpu_custom_call.1} parent=11 // pred_fallthru
          _
        // Predicated region
        $region17: #{tpu_custom_call.1} parent=11 // pred_check
          %p190 = pneg %p112
        $region18: #{tpu_custom_call.1} parent=11 // pred_check_branch
          %192 = sbr.rel (%p190) target = $region20
        $region19: #{tpu_custom_call.1} parent=11 // pred_region
          %p193 = scmp.lt.s32.totalorder %s25, 0
          %s194 = scalar_select %p193, %s25, 0
          %s195 = scalar_lea.vmem %s2, %s194
        $region20: #{tpu_custom_call.1} parent=11 // pred_fallthru
          _
        // Predicated region
        $region21: #{tpu_custom_call.1} parent=11 // pred_check
          %p196 = pneg %p138
        $region22: #{tpu_custom_call.1} parent=11 // pred_check_branch
          %198 = sbr.rel (%p196) target = $region24
        $region23: #{tpu_custom_call.1} parent=11 // pred_region
          %p199 = scmp.lt.s32.totalorder %s25, 0
          %s200 = scalar_select %p199, %s25, 0
          %s201 = scalar_lea.vmem %s3, %s200
        $region24: #{tpu_custom_call.1} parent=11 // pred_fallthru
          _
      $region12: #{tpu_custom_call.1} parent=5 // pred_fallthru
        _
      %p202 = scmp.lt.s32.totalorder %s13, 4
      // Predicated region
      $region25: #{tpu_custom_call.1} parent=5 // pred_check
        %p203 = pneg %p202
      $region26: #{tpu_custom_call.1} parent=5 // pred_check_branch
        %205 = sbr.rel (%p203) target = $region28
      $region27: #{tpu_custom_call.1} parent=5 // pred_region
        // Predicated region
        $region29: #{tpu_custom_call.1} parent=27 // pred_check
          %p206 = pneg %p54
        $region30: #{tpu_custom_call.1} parent=27 // pred_check_branch
          %208 = sbr.rel (%p206) target = $region32
        $region31: #{tpu_custom_call.1} parent=27 // pred_region
          %p209 = scmp.lt.s32.totalorder %s20, 1
          %s210 = scalar_select %p209, %s20, 1
          %p211 = scmp.lt.s32.totalorder %s21, 1
          %s212 = scalar_select %p211, %s21, 1
          %s213 = smul.addr %s212, 30
          %s214 = smul.addr %s210, 60
          %s215 = sadd.s32 %s213, %s214
          %s216 = smul.addr %s215, 4
          %s217 = scalar_lea.vmem %s0, %s216
        $region32: #{tpu_custom_call.1} parent=27 // pred_fallthru
          _
      $region28: #{tpu_custom_call.1} parent=5 // pred_fallthru
        _
      %p218 = scmp.le.s32.totalorder 1, %s13
      %p219 = scmp.lt.s32.totalorder %s13, 5
      %p220 = pnand %p218, %p219
      %p221 = pneg %p220
      // Predicated region
      $region33: #{tpu_custom_call.1} parent=5 // pred_check
        _
      $region34: #{tpu_custom_call.1} parent=5 // pred_check_branch
        %223 = sbr.rel (%p220) target = $region36
      $region35: #{tpu_custom_call.1} parent=5 // pred_region
        %s224 = ssub.s32 %s13, 1
        %p225 = scmp.lt.s32.totalorder %s23, 1
        %s226 = scalar_select %p225, %s23, 1
        %p227 = scmp.lt.s32.totalorder %s24, 1
        %s228 = scalar_select %p227, %s24, 1
        %s229 = smul.addr %s228, 30
        %s230 = smul.addr %s226, 60
        %s231 = sadd.s32 %s229, %s230
        %s232 = smul.addr %s231, 4
        %s233 = scalar_lea.vmem %s0, %s232
        %p234 = pneg %p60
        %p235 = pneg %p57
        %p236 = scmp.lt.s32.totalorder %s25, 0
        %s237 = scalar_select %p236, %s25, 0
        %s238 = smul.addr %s237, 4
        %s239 = scalar_lea.vmem %s1, %s238
        %p240 = pneg %p86
        %p241 = pneg %p83
        %p242 = scmp.lt.s32.totalorder %s25, 0
        %s243 = scalar_select %p242, %s25, 0
        %s244 = scalar_lea.vmem %s2, %s243
        %p245 = pneg %p112
        %p246 = pneg %p109
        %p247 = scmp.lt.s32.totalorder %s25, 0
        %s248 = scalar_select %p247, %s25, 0
        %s249 = scalar_lea.vmem %s3, %s248
        %p250 = pneg %p138
        %p251 = pneg %p135
        %p252 = pneg %p168
        %p253 = pneg %p165
        %s254 = sand.u32 %s155, 1
        %s255 = scalar_lea.sflag [#allocation3], %s254
        %s256 = sand.u32 %s155, 1
        %s257 = smul.addr %s256, 128
        %s258 = scalar_lea.vmem [#allocation2], %s257
        %p259 = scmp.lt.s32.totalorder %s23, 1
        %s260 = scalar_select %p259, %s23, 1
        %p261 = scmp.lt.s32.totalorder %s24, 1
        %s262 = scalar_select %p261, %s24, 1
        %s263 = smul.addr %s262, 30
        %s264 = smul.addr %s260, 60
        %s265 = sadd.s32 %s263, %s264
        %s266 = smul.addr %s265, 4
        %s267 = scalar_lea.vmem %s0, %s266
        %p268 = scmp.lt.s32.totalorder %s25, 0
        %s269 = scalar_select %p268, %s25, 0
        %s270 = smul.addr %s269, 4
        %s271 = scalar_lea.vmem %s1, %s270
        %p272 = scmp.lt.s32.totalorder %s25, 0
        %s273 = scalar_select %p272, %s25, 0
        %s274 = scalar_lea.vmem %s2, %s273
        %p275 = scmp.lt.s32.totalorder %s25, 0
        %s276 = scalar_select %p275, %s25, 0
        %s277 = scalar_lea.vmem %s3, %s276
        %s278 = smul.u32 8, %s24
        %v279 = vld [vmem:[%s267] sm:$0xf]
        %v280 = vld [vmem:[%s267 + $0x4] sm:$0xf]
        %v281 = vld [vmem:[%s267 + $0x8] sm:$0x1]
        %v282 = vld [vmem:[%s267 + $0xc] sm:$0xf]
        %v283 = vld [vmem:[%s267 + $0x10] sm:$0xf]
        %v284 = vld [vmem:[%s267 + $0x14] sm:$0x1]
        %v285 = vld [vmem:[%s267 + $0x18] sm:$0xf]
        %v286 = vld [vmem:[%s267 + $0x1c] sm:$0xf]
        %v287 = vld [vmem:[%s267 + $0x20] sm:$0x1]
        %v288 = vld [vmem:[%s267 + $0x24] sm:$0xf]
        %v289 = vld [vmem:[%s267 + $0x28] sm:$0xf]
        %v290 = vld [vmem:[%s267 + $0x2c] sm:$0x1]
        %v291 = vld [vmem:[%s267 + $0x30] sm:$0xf]
        %v292 = vld [vmem:[%s267 + $0x34] sm:$0xf]
        %v293 = vld [vmem:[%s267 + $0x38] sm:$0x1]
        %v294 = vld [vmem:[%s267 + $0x3c] sm:$0xf]
        %v295 = vld [vmem:[%s267 + $0x40] sm:$0xf]
        %v296 = vld [vmem:[%s267 + $0x44] sm:$0x1]
        %v297 = vld [vmem:[%s267 + $0x48] sm:$0xf]
        %v298 = vld [vmem:[%s267 + $0x4c] sm:$0xf]
        %v299 = vld [vmem:[%s267 + $0x50] sm:$0x1]
        %v300 = vld [vmem:[%s267 + $0x54] sm:$0xf]
        %v301 = vld [vmem:[%s267 + $0x58] sm:$0xf]
        %v302 = vld [vmem:[%s267 + $0x5c] sm:$0x1]
        %v303 = vld [vmem:[%s267 + $0x60] sm:$0xf]
        %v304 = vld [vmem:[%s267 + $0x64] sm:$0xf]
        %v305 = vld [vmem:[%s267 + $0x68] sm:$0x1]
        %v306 = vld [vmem:[%s267 + $0x6c] sm:$0xf]
        %v307 = vld [vmem:[%s267 + $0x70] sm:$0xf]
        %v308 = vld [vmem:[%s267 + $0x74] sm:$0x1]
        %v329 = vunpack.c.l.b16 %v279
        %v330 = vunpack.c.l.b16 %v280
        %v331 = vunpack.c.l.b16 %v282
        %v332 = vunpack.c.l.b16 %v283
        %v333 = vunpack.c.l.b16 %v285
        %v334 = vunpack.c.l.b16 %v286
        %v335 = vunpack.c.l.b16 %v288
        %v336 = vunpack.c.l.b16 %v289
        %v337 = vunpack.c.l.b16 %v291
        %v338 = vunpack.c.l.b16 %v292
        %v339 = vunpack.c.l.b16 %v294
        %v340 = vunpack.c.l.b16 %v295
        %v341 = vunpack.c.l.b16 %v297
        %v342 = vunpack.c.l.b16 %v298
        %v343 = vunpack.c.l.b16 %v300
        %v344 = vunpack.c.l.b16 %v301
        %v345 = vunpack.c.l.b16 %v303
        %v346 = vunpack.c.l.b16 %v304
        %v347 = vunpack.c.l.b16 %v306
        %v348 = vunpack.c.l.b16 %v307
        %v349 = vpack.c.b16 %v330, %v329
        %v350 = vpack.c.b16 %v332, %v331
        %v351 = vpack.c.b16 %v334, %v333
        %v352 = vpack.c.b16 %v336, %v335
        %v353 = vpack.c.b16 %v338, %v337
        %v354 = vpack.c.b16 %v340, %v339
        %v355 = vpack.c.b16 %v342, %v341
        %v356 = vpack.c.b16 %v344, %v343
        %v357 = vpack.c.b16 %v346, %v345
        %v358 = vpack.c.b16 %v348, %v347
        %v379 = vunpack.c.l.b16 %v281
        %v380 = vunpack.c.l.b16 %v284
        %v381 = vunpack.c.l.b16 %v287
        %v382 = vunpack.c.l.b16 %v290
        %v383 = vunpack.c.l.b16 %v293
        %v384 = vunpack.c.l.b16 %v296
        %v385 = vunpack.c.l.b16 %v299
        %v386 = vunpack.c.l.b16 %v302
        %v387 = vunpack.c.l.b16 %v305
        %v388 = vunpack.c.l.b16 %v308
        %v389 = vpack.c.b16 %v379, %v379
        %v390 = vpack.c.b16 %v380, %v380
        %v391 = vpack.c.b16 %v381, %v381
        %v392 = vpack.c.b16 %v382, %v382
        %v393 = vpack.c.b16 %v383, %v383
        %v394 = vpack.c.b16 %v384, %v384
        %v395 = vpack.c.b16 %v385, %v385
        %v396 = vpack.c.b16 %v386, %v386
        %v397 = vpack.c.b16 %v387, %v387
        %v398 = vpack.c.b16 %v388, %v388
        %vm399 = vsmask.f32 7424
        %v401 = vshrl.u32 %v349, 16
        %v403 = vshll.u32 %v349, 16
        %v405 = vrot.slane %v403, 1
        %v406 = vor.u32 %v401, %v405
        %v408 = vshll.u32 %v389, 16
        %v410 = vrot.slane %v408, 1
        %v411 = vsel %vm399, %v406, %v410
        %v413 = vshrl.u32 %v350, 16
        %v415 = vshll.u32 %v350, 16
        %v417 = vrot.slane %v415, 1
        %v418 = vor.u32 %v413, %v417
        %v420 = vshll.u32 %v390, 16
        %v422 = vrot.slane %v420, 1
        %v423 = vsel %vm399, %v418, %v422
        %v425 = vshrl.u32 %v351, 16
        %v427 = vshll.u32 %v351, 16
        %v429 = vrot.slane %v427, 1
        %v430 = vor.u32 %v425, %v429
        %v432 = vshll.u32 %v391, 16
        %v434 = vrot.slane %v432, 1
        %v435 = vsel %vm399, %v430, %v434
        %v437 = vshrl.u32 %v352, 16
        %v439 = vshll.u32 %v352, 16
        %v441 = vrot.slane %v439, 1
        %v442 = vor.u32 %v437, %v441
        %v444 = vshll.u32 %v392, 16
        %v446 = vrot.slane %v444, 1
        %v447 = vsel %vm399, %v442, %v446
        %v449 = vshrl.u32 %v353, 16
        %v451 = vshll.u32 %v353, 16
        %v453 = vrot.slane %v451, 1
        %v454 = vor.u32 %v449, %v453
        %v456 = vshll.u32 %v393, 16
        %v458 = vrot.slane %v456, 1
        %v459 = vsel %vm399, %v454, %v458
        %v461 = vshrl.u32 %v354, 16
        %v463 = vshll.u32 %v354, 16
        %v465 = vrot.slane %v463, 1
        %v466 = vor.u32 %v461, %v465
        %v468 = vshll.u32 %v394, 16
        %v470 = vrot.slane %v468, 1
        %v471 = vsel %vm399, %v466, %v470
        %v473 = vshrl.u32 %v355, 16
        %v475 = vshll.u32 %v355, 16
        %v477 = vrot.slane %v475, 1
        %v478 = vor.u32 %v473, %v477
        %v480 = vshll.u32 %v395, 16
        %v482 = vrot.slane %v480, 1
        %v483 = vsel %vm399, %v478, %v482
        %v485 = vshrl.u32 %v356, 16
        %v487 = vshll.u32 %v356, 16
        %v489 = vrot.slane %v487, 1
        %v490 = vor.u32 %v485, %v489
        %v492 = vshll.u32 %v396, 16
        %v494 = vrot.slane %v492, 1
        %v495 = vsel %vm399, %v490, %v494
        %v497 = vshrl.u32 %v357, 16
        %v499 = vshll.u32 %v357, 16
        %v501 = vrot.slane %v499, 1
        %v502 = vor.u32 %v497, %v501
        %v504 = vshll.u32 %v397, 16
        %v506 = vrot.slane %v504, 1
        %v507 = vsel %vm399, %v502, %v506
        %v509 = vshrl.u32 %v358, 16
        %v511 = vshll.u32 %v358, 16
        %v513 = vrot.slane %v511, 1
        %v514 = vor.u32 %v509, %v513
        %v516 = vshll.u32 %v398, 16
        %v518 = vrot.slane %v516, 1
        %v519 = vsel %vm399, %v514, %v518
        %vm530 = vcmask 1046528
        %v531 = vrot.slane %v349, 1
        %v532 = vrot.slane %v389, 1
        %v533 = vsel %vm530, %v531, %v532
        %v534 = vrot.slane %v350, 1
        %v535 = vrot.slane %v390, 1
        %v536 = vsel %vm530, %v534, %v535
        %v537 = vrot.slane %v351, 1
        %v538 = vrot.slane %v391, 1
        %v539 = vsel %vm530, %v537, %v538
        %v540 = vrot.slane %v352, 1
        %v541 = vrot.slane %v392, 1
        %v542 = vsel %vm530, %v540, %v541
        %v543 = vrot.slane %v353, 1
        %v544 = vrot.slane %v393, 1
        %v545 = vsel %vm530, %v543, %v544
        %v546 = vrot.slane %v354, 1
        %v547 = vrot.slane %v394, 1
        %v548 = vsel %vm530, %v546, %v547
        %v549 = vrot.slane %v355, 1
        %v550 = vrot.slane %v395, 1
        %v551 = vsel %vm530, %v549, %v550
        %v552 = vrot.slane %v356, 1
        %v553 = vrot.slane %v396, 1
        %v554 = vsel %vm530, %v552, %v553
        %v555 = vrot.slane %v357, 1
        %v556 = vrot.slane %v397, 1
        %v557 = vsel %vm530, %v555, %v556
        %v558 = vrot.slane %v358, 1
        %v559 = vrot.slane %v398, 1
        %v560 = vsel %vm530, %v558, %v559
        %v571 = vld [vmem:[%s271] sm:$0xf]
        %v572 = vld [vmem:[%s271 + $0x4] sm:$0xf]
        %v573 = vld [vmem:[%s271 + $0x8] sm:$0xf]
        %v574 = vld [vmem:[%s271 + $0xc] sm:$0xf]
        %v575 = vld [vmem:[%s271 + $0x10] sm:$0xf]
        %v576 = vld [vmem:[%s271 + $0x14] sm:$0xf]
        %v577 = vld [vmem:[%s271 + $0x18] sm:$0xf]
        %v578 = vld [vmem:[%s271 + $0x1c] sm:$0xf]
        %v579 = vld [vmem:[%s271 + $0x20] sm:$0xf]
        %v580 = vld [vmem:[%s271 + $0x24] sm:$0xf]
        %v581 = vld [vmem:[%s271 + $0x28] sm:$0xf]
        %v582 = vld [vmem:[%s271 + $0x2c] sm:$0xf]
        %v583 = vld [vmem:[%s271 + $0x30] sm:$0xf]
        %v584 = vld [vmem:[%s271 + $0x34] sm:$0xf]
        %v585 = vld [vmem:[%s271 + $0x38] sm:$0xf]
        %v586 = vld [vmem:[%s271 + $0x3c] sm:$0xf]
        %v587 = vld [vmem:[%s271 + $0x40] sm:$0xf]
        %v588 = vld [vmem:[%s271 + $0x44] sm:$0xf]
        %v589 = vld [vmem:[%s271 + $0x48] sm:$0xf]
        %v590 = vld [vmem:[%s271 + $0x4c] sm:$0xf]
        %v591 = vld [vmem:[%s271 + $0x50] sm:$0xf]
        %v592 = vld [vmem:[%s271 + $0x54] sm:$0xf]
        %v593 = vld [vmem:[%s271 + $0x58] sm:$0xf]
        %v594 = vld [vmem:[%s271 + $0x5c] sm:$0xf]
        %v595 = vld [vmem:[%s271 + $0x60] sm:$0xf]
        %v596 = vld [vmem:[%s271 + $0x64] sm:$0xf]
        %v597 = vld [vmem:[%s271 + $0x68] sm:$0xf]
        %v598 = vld [vmem:[%s271 + $0x6c] sm:$0xf]
        %v599 = vld [vmem:[%s271 + $0x70] sm:$0xf]
        %v600 = vld [vmem:[%s271 + $0x74] sm:$0xf]
        %v601 = vld [vmem:[%s271 + $0x78] sm:$0xf]
        %v602 = vld [vmem:[%s271 + $0x7c] sm:$0xf]
        %v603 = vld [vmem:[%s271 + $0x80] sm:$0xf]
        %v604 = vld [vmem:[%s271 + $0x84] sm:$0xf]
        %v605 = vld [vmem:[%s271 + $0x88] sm:$0xf]
        %v606 = vld [vmem:[%s271 + $0x8c] sm:$0xf]
        %v607 = vld [vmem:[%s271 + $0x90] sm:$0xf]
        %v608 = vld [vmem:[%s271 + $0x94] sm:$0xf]
        %v609 = vld [vmem:[%s271 + $0x98] sm:$0xf]
        %v610 = vld [vmem:[%s271 + $0x9c] sm:$0xf]
        %v611 = vld [vmem:[%s271 + $0xa0] sm:$0xf]
        %v612 = vld [vmem:[%s271 + $0xa4] sm:$0xf]
        %v613 = vld [vmem:[%s271 + $0xa8] sm:$0xf]
        %v614 = vld [vmem:[%s271 + $0xac] sm:$0xf]
        %v615 = vld [vmem:[%s271 + $0xb0] sm:$0xf]
        %v616 = vld [vmem:[%s271 + $0xb4] sm:$0xf]
        %v617 = vld [vmem:[%s271 + $0xb8] sm:$0xf]
        %v618 = vld [vmem:[%s271 + $0xbc] sm:$0xf]
        %s619 = scalar_lea.vmem %s271, 192
        %v620 = vld [vmem:[%s619] sm:$0xf]
        %v621 = vld [vmem:[%s619 + $0x4] sm:$0xf]
        %v622 = vld [vmem:[%s619 + $0x8] sm:$0xf]
        %v623 = vld [vmem:[%s619 + $0xc] sm:$0xf]
        %v624 = vld [vmem:[%s619 + $0x10] sm:$0xf]
        %v625 = vld [vmem:[%s619 + $0x14] sm:$0xf]
        %v626 = vld [vmem:[%s619 + $0x18] sm:$0xf]
        %v627 = vld [vmem:[%s619 + $0x1c] sm:$0xf]
        %v628 = vld [vmem:[%s619 + $0x20] sm:$0xf]
        %v629 = vld [vmem:[%s619 + $0x24] sm:$0xf]
        %v630 = vld [vmem:[%s619 + $0x28] sm:$0xf]
        %v631 = vld [vmem:[%s619 + $0x2c] sm:$0xf]
        %v632 = vld [vmem:[%s619 + $0x30] sm:$0xf]
        %v633 = vld [vmem:[%s619 + $0x34] sm:$0xf]
        %v634 = vld [vmem:[%s619 + $0x38] sm:$0xf]
        %v635 = vld [vmem:[%s619 + $0x3c] sm:$0xf]
        %v636 = vld [vmem:[%s619 + $0x40] sm:$0xf]
        %v637 = vld [vmem:[%s619 + $0x44] sm:$0xf]
        %v638 = vld [vmem:[%s619 + $0x48] sm:$0xf]
        %v639 = vld [vmem:[%s619 + $0x4c] sm:$0xf]
        %v640 = vld [vmem:[%s619 + $0x50] sm:$0xf]
        %v641 = vld [vmem:[%s619 + $0x54] sm:$0xf]
        %v642 = vld [vmem:[%s619 + $0x58] sm:$0xf]
        %v643 = vld [vmem:[%s619 + $0x5c] sm:$0xf]
        %v644 = vld [vmem:[%s619 + $0x60] sm:$0xf]
        %v645 = vld [vmem:[%s619 + $0x64] sm:$0xf]
        %v646 = vld [vmem:[%s619 + $0x68] sm:$0xf]
        %v647 = vld [vmem:[%s619 + $0x6c] sm:$0xf]
        %v648 = vld [vmem:[%s619 + $0x70] sm:$0xf]
        %v649 = vld [vmem:[%s619 + $0x74] sm:$0xf]
        %v650 = vld [vmem:[%s619 + $0x78] sm:$0xf]
        %v651 = vld [vmem:[%s619 + $0x7c] sm:$0xf]
        %v652 = vld [vmem:[%s619 + $0x80] sm:$0xf]
        %v653 = vld [vmem:[%s619 + $0x84] sm:$0xf]
        %v654 = vld [vmem:[%s619 + $0x88] sm:$0xf]
        %v655 = vld [vmem:[%s619 + $0x8c] sm:$0xf]
        %v656 = vld [vmem:[%s619 + $0x90] sm:$0xf]
        %v657 = vld [vmem:[%s619 + $0x94] sm:$0xf]
        %v658 = vld [vmem:[%s619 + $0x98] sm:$0xf]
        %v659 = vld [vmem:[%s619 + $0x9c] sm:$0xf]
        %v660 = vld [vmem:[%s619 + $0xa0] sm:$0xf]
        %v661 = vld [vmem:[%s619 + $0xa4] sm:$0xf]
        %v662 = vld [vmem:[%s619 + $0xa8] sm:$0xf]
        %v663 = vld [vmem:[%s619 + $0xac] sm:$0xf]
        %v664 = vld [vmem:[%s619 + $0xb0] sm:$0xf]
        %v665 = vld [vmem:[%s619 + $0xb4] sm:$0xf]
        %v666 = vld [vmem:[%s619 + $0xb8] sm:$0xf]
        %v667 = vld [vmem:[%s619 + $0xbc] sm:$0xf]
        %v716 = vunpack.c.l.b16 %v620
        %v717 = vunpack.c.l.b16 %v621
        %v718 = vunpack.c.l.b16 %v622
        %v719 = vunpack.c.l.b16 %v623
        %v720 = vunpack.c.l.b16 %v624
        %v721 = vunpack.c.l.b16 %v625
        %v722 = vunpack.c.l.b16 %v626
        %v723 = vunpack.c.l.b16 %v627
        %v724 = vunpack.c.l.b16 %v628
        %v725 = vunpack.c.l.b16 %v629
        %v726 = vunpack.c.l.b16 %v630
        %v727 = vunpack.c.l.b16 %v631
        %v728 = vunpack.c.l.b16 %v632
        %v729 = vunpack.c.l.b16 %v633
        %v730 = vunpack.c.l.b16 %v634
        %v731 = vunpack.c.l.b16 %v635
        %v732 = vunpack.c.l.b16 %v636
        %v733 = vunpack.c.l.b16 %v637
        %v734 = vunpack.c.l.b16 %v638
        %v735 = vunpack.c.l.b16 %v639
        %v736 = vunpack.c.l.b16 %v640
        %v737 = vunpack.c.l.b16 %v641
        %v738 = vunpack.c.l.b16 %v642
        %v739 = vunpack.c.l.b16 %v643
        %v740 = vunpack.c.l.b16 %v644
        %v741 = vunpack.c.l.b16 %v645
        %v742 = vunpack.c.l.b16 %v646
        %v743 = vunpack.c.l.b16 %v647
        %v744 = vunpack.c.l.b16 %v648
        %v745 = vunpack.c.l.b16 %v649
        %v746 = vunpack.c.l.b16 %v650
        %v747 = vunpack.c.l.b16 %v651
        %v748 = vunpack.c.l.b16 %v652
        %v749 = vunpack.c.l.b16 %v653
        %v750 = vunpack.c.l.b16 %v654
        %v751 = vunpack.c.l.b16 %v655
        %v752 = vunpack.c.l.b16 %v656
        %v753 = vunpack.c.l.b16 %v657
        %v754 = vunpack.c.l.b16 %v658
        %v755 = vunpack.c.l.b16 %v659
        %v756 = vunpack.c.l.b16 %v660
        %v757 = vunpack.c.l.b16 %v661
        %v758 = vunpack.c.l.b16 %v662
        %v759 = vunpack.c.l.b16 %v663
        %v760 = vunpack.c.l.b16 %v664
        %v761 = vunpack.c.l.b16 %v665
        %v762 = vunpack.c.l.b16 %v666
        %v763 = vunpack.c.l.b16 %v667
        %v764 = vpack.c.b16 %v717, %v716
        %v765 = vpack.c.b16 %v719, %v718
        %v766 = vpack.c.b16 %v721, %v720
        %v767 = vpack.c.b16 %v723, %v722
        %v768 = vpack.c.b16 %v725, %v724
        %v769 = vpack.c.b16 %v727, %v726
        %v770 = vpack.c.b16 %v729, %v728
        %v771 = vpack.c.b16 %v731, %v730
        %v772 = vpack.c.b16 %v733, %v732
        %v773 = vpack.c.b16 %v735, %v734
        %v774 = vpack.c.b16 %v737, %v736
        %v775 = vpack.c.b16 %v739, %v738
        %v776 = vpack.c.b16 %v741, %v740
        %v777 = vpack.c.b16 %v743, %v742
        %v778 = vpack.c.b16 %v745, %v744
        %v779 = vpack.c.b16 %v747, %v746
        %v780 = vpack.c.b16 %v749, %v748
        %v781 = vpack.c.b16 %v751, %v750
        %v782 = vpack.c.b16 %v753, %v752
        %v783 = vpack.c.b16 %v755, %v754
        %v784 = vpack.c.b16 %v757, %v756
        %v785 = vpack.c.b16 %v759, %v758
        %v786 = vpack.c.b16 %v761, %v760
        %v787 = vpack.c.b16 %v763, %v762
        %812 = vmatpush.bf16.msra.mxu0 %v771
        %813 = vmatpush.bf16.msra.mxu0 %v770
        %814 = vmatpush.bf16.msra.mxu0 %v769
        %815 = vmatpush.bf16.msra.mxu0 %v768
        %816 = vmatpush.bf16.msra.mxu0 %v767
        %817 = vmatpush.bf16.msra.mxu0 %v766
        %818 = vmatpush.bf16.msra.mxu0 %v765
        %819 = vmatpush.bf16.msra.mxu0 %v764
        %820 = vmatmul.bf16.gmra.mxu0 %v350
        %v821 = vpop.f32.mrf.mxu0
        %v822 = vadd.f32 0.0, %v821
        %v823 = vpop.f32.mrf.mxu0
        %v824 = vadd.f32 0.0, %v823
        %825 = vmatmul.bf16.gmra.mxu0 %v351
        %v826 = vpop.f32.mrf.mxu0
        %v827 = vadd.f32 0.0, %v826
        %v828 = vpop.f32.mrf.mxu0
        %v829 = vadd.f32 0.0, %v828
        %830 = vmatmul.bf16.gmra.mxu0 %v352
        %v831 = vpop.f32.mrf.mxu0
        %v832 = vadd.f32 0.0, %v831
        %v833 = vpop.f32.mrf.mxu0
        %v834 = vadd.f32 0.0, %v833
        %835 = vmatmul.bf16.gmra.mxu0 %v353
        %v836 = vpop.f32.mrf.mxu0
        %v837 = vadd.f32 0.0, %v836
        %v838 = vpop.f32.mrf.mxu0
        %v839 = vadd.f32 0.0, %v838
        %840 = vmatmul.bf16.gmra.mxu0 %v354
        %v841 = vpop.f32.mrf.mxu0
        %v842 = vadd.f32 0.0, %v841
        %v843 = vpop.f32.mrf.mxu0
        %v844 = vadd.f32 0.0, %v843
        %845 = vmatmul.bf16.gmra.mxu0 %v355
        %v846 = vpop.f32.mrf.mxu0
        %v847 = vadd.f32 0.0, %v846
        %v848 = vpop.f32.mrf.mxu0
        %v849 = vadd.f32 0.0, %v848
        %850 = vmatmul.bf16.gmra.mxu0 %v356
        %v851 = vpop.f32.mrf.mxu0
        %v852 = vadd.f32 0.0, %v851
        %v853 = vpop.f32.mrf.mxu0
        %v854 = vadd.f32 0.0, %v853
        %855 = vmatmul.bf16.gmra.mxu0 %v357
        %v856 = vpop.f32.mrf.mxu0
        %v857 = vadd.f32 0.0, %v856
        %v858 = vpop.f32.mrf.mxu0
        %v859 = vadd.f32 0.0, %v858
        %860 = vdwg.mxu0
        %861 = vmatpush.bf16.msra.mxu0 %v779
        %862 = vmatpush.bf16.msra.mxu0 %v778
        %863 = vmatpush.bf16.msra.mxu0 %v777
        %864 = vmatpush.bf16.msra.mxu0 %v776
        %865 = vmatpush.bf16.msra.mxu0 %v775
        %866 = vmatpush.bf16.msra.mxu0 %v774
        %867 = vmatpush.bf16.msra.mxu0 %v773
        %868 = vmatpush.bf16.msra.mxu0 %v772
        %869 = vmatmul.bf16.gmra.mxu0 %v423
        %v870 = vpop.f32.mrf.mxu0
        %v871 = vadd.f32 %v822, %v870
        %v872 = vpop.f32.mrf.mxu0
        %v873 = vadd.f32 %v824, %v872
        %874 = vmatmul.bf16.gmra.mxu0 %v435
        %v875 = vpop.f32.mrf.mxu0
        %v876 = vadd.f32 %v827, %v875
        %v877 = vpop.f32.mrf.mxu0
        %v878 = vadd.f32 %v829, %v877
        %879 = vmatmul.bf16.gmra.mxu0 %v447
        %v880 = vpop.f32.mrf.mxu0
        %v881 = vadd.f32 %v832, %v880
        %v882 = vpop.f32.mrf.mxu0
        %v883 = vadd.f32 %v834, %v882
        %884 = vmatmul.bf16.gmra.mxu0 %v459
        %v885 = vpop.f32.mrf.mxu0
        %v886 = vadd.f32 %v837, %v885
        %v887 = vpop.f32.mrf.mxu0
        %v888 = vadd.f32 %v839, %v887
        %889 = vmatmul.bf16.gmra.mxu0 %v471
        %v890 = vpop.f32.mrf.mxu0
        %v891 = vadd.f32 %v842, %v890
        %v892 = vpop.f32.mrf.mxu0
        %v893 = vadd.f32 %v844, %v892
        %894 = vmatmul.bf16.gmra.mxu0 %v483
        %v895 = vpop.f32.mrf.mxu0
        %v896 = vadd.f32 %v847, %v895
        %v897 = vpop.f32.mrf.mxu0
        %v898 = vadd.f32 %v849, %v897
        %899 = vmatmul.bf16.gmra.mxu0 %v495
        %v900 = vpop.f32.mrf.mxu0
        %v901 = vadd.f32 %v852, %v900
        %v902 = vpop.f32.mrf.mxu0
        %v903 = vadd.f32 %v854, %v902
        %904 = vmatmul.bf16.gmra.mxu0 %v507
        %v905 = vpop.f32.mrf.mxu0
        %v906 = vadd.f32 %v857, %v905
        %v907 = vpop.f32.mrf.mxu0
        %v908 = vadd.f32 %v859, %v907
        %909 = vdwg.mxu0
        %910 = vmatpush.bf16.msra.mxu0 %v787
        %911 = vmatpush.bf16.msra.mxu0 %v786
        %912 = vmatpush.bf16.msra.mxu0 %v785
        %913 = vmatpush.bf16.msra.mxu0 %v784
        %914 = vmatpush.bf16.msra.mxu0 %v783
        %915 = vmatpush.bf16.msra.mxu0 %v782
        %916 = vmatpush.bf16.msra.mxu0 %v781
        %917 = vmatpush.bf16.msra.mxu0 %v780
        %918 = vmatmul.bf16.gmra.mxu0 %v536
        %v919 = vpop.f32.mrf.mxu0
        %v920 = vadd.f32 %v871, %v919
        %v921 = vpop.f32.mrf.mxu0
        %v922 = vadd.f32 %v873, %v921
        %923 = vmatmul.bf16.gmra.mxu0 %v539
        %v924 = vpop.f32.mrf.mxu0
        %v925 = vadd.f32 %v876, %v924
        %v926 = vpop.f32.mrf.mxu0
        %v927 = vadd.f32 %v878, %v926
        %928 = vmatmul.bf16.gmra.mxu0 %v542
        %v929 = vpop.f32.mrf.mxu0
        %v930 = vadd.f32 %v881, %v929
        %v931 = vpop.f32.mrf.mxu0
        %v932 = vadd.f32 %v883, %v931
        %933 = vmatmul.bf16.gmra.mxu0 %v545
        %v934 = vpop.f32.mrf.mxu0
        %v935 = vadd.f32 %v886, %v934
        %v936 = vpop.f32.mrf.mxu0
        %v937 = vadd.f32 %v888, %v936
        %938 = vmatmul.bf16.gmra.mxu0 %v548
        %v939 = vpop.f32.mrf.mxu0
        %v940 = vadd.f32 %v891, %v939
        %v941 = vpop.f32.mrf.mxu0
        %v942 = vadd.f32 %v893, %v941
        %943 = vmatmul.bf16.gmra.mxu0 %v551
        %v944 = vpop.f32.mrf.mxu0
        %v945 = vadd.f32 %v896, %v944
        %v946 = vpop.f32.mrf.mxu0
        %v947 = vadd.f32 %v898, %v946
        %948 = vmatmul.bf16.gmra.mxu0 %v554
        %v949 = vpop.f32.mrf.mxu0
        %v950 = vadd.f32 %v901, %v949
        %v951 = vpop.f32.mrf.mxu0
        %v952 = vadd.f32 %v903, %v951
        %953 = vmatmul.bf16.gmra.mxu0 %v557
        %v954 = vpop.f32.mrf.mxu0
        %v955 = vadd.f32 %v906, %v954
        %v956 = vpop.f32.mrf.mxu0
        %v957 = vadd.f32 %v908, %v956
        %958 = vdwg.mxu0
        %v1007 = vunpack.c.l.b16 %v571
        %v1008 = vunpack.c.l.b16 %v572
        %v1009 = vunpack.c.l.b16 %v573
        %v1010 = vunpack.c.l.b16 %v574
        %v1011 = vunpack.c.l.b16 %v575
        %v1012 = vunpack.c.l.b16 %v576
        %v1013 = vunpack.c.l.b16 %v577
        %v1014 = vunpack.c.l.b16 %v578
        %v1015 = vunpack.c.l.b16 %v579
        %v1016 = vunpack.c.l.b16 %v580
        %v1017 = vunpack.c.l.b16 %v581
        %v1018 = vunpack.c.l.b16 %v582
        %v1019 = vunpack.c.l.b16 %v583
        %v1020 = vunpack.c.l.b16 %v584
        %v1021 = vunpack.c.l.b16 %v585
        %v1022 = vunpack.c.l.b16 %v586
        %v1023 = vunpack.c.l.b16 %v587
        %v1024 = vunpack.c.l.b16 %v588
        %v1025 = vunpack.c.l.b16 %v589
        %v1026 = vunpack.c.l.b16 %v590
        %v1027 = vunpack.c.l.b16 %v591
        %v1028 = vunpack.c.l.b16 %v592
        %v1029 = vunpack.c.l.b16 %v593
        %v1030 = vunpack.c.l.b16 %v594
        %v1031 = vunpack.c.l.b16 %v595
        %v1032 = vunpack.c.l.b16 %v596
        %v1033 = vunpack.c.l.b16 %v597
        %v1034 = vunpack.c.l.b16 %v598
        %v1035 = vunpack.c.l.b16 %v599
        %v1036 = vunpack.c.l.b16 %v600
        %v1037 = vunpack.c.l.b16 %v601
        %v1038 = vunpack.c.l.b16 %v602
        %v1039 = vunpack.c.l.b16 %v603
        %v1040 = vunpack.c.l.b16 %v604
        %v1041 = vunpack.c.l.b16 %v605
        %v1042 = vunpack.c.l.b16 %v606
        %v1043 = vunpack.c.l.b16 %v607
        %v1044 = vunpack.c.l.b16 %v608
        %v1045 = vunpack.c.l.b16 %v609
        %v1046 = vunpack.c.l.b16 %v610
        %v1047 = vunpack.c.l.b16 %v611
        %v1048 = vunpack.c.l.b16 %v612
        %v1049 = vunpack.c.l.b16 %v613
        %v1050 = vunpack.c.l.b16 %v614
        %v1051 = vunpack.c.l.b16 %v615
        %v1052 = vunpack.c.l.b16 %v616
        %v1053 = vunpack.c.l.b16 %v617
        %v1054 = vunpack.c.l.b16 %v618
        %v1055 = vpack.c.b16 %v1008, %v1007
        %v1056 = vpack.c.b16 %v1010, %v1009
        %v1057 = vpack.c.b16 %v1012, %v1011
        %v1058 = vpack.c.b16 %v1014, %v1013
        %v1059 = vpack.c.b16 %v1016, %v1015
        %v1060 = vpack.c.b16 %v1018, %v1017
        %v1061 = vpack.c.b16 %v1020, %v1019
        %v1062 = vpack.c.b16 %v1022, %v1021
        %v1063 = vpack.c.b16 %v1024, %v1023
        %v1064 = vpack.c.b16 %v1026, %v1025
        %v1065 = vpack.c.b16 %v1028, %v1027
        %v1066 = vpack.c.b16 %v1030, %v1029
        %v1067 = vpack.c.b16 %v1032, %v1031
        %v1068 = vpack.c.b16 %v1034, %v1033
        %v1069 = vpack.c.b16 %v1036, %v1035
        %v1070 = vpack.c.b16 %v1038, %v1037
        %v1071 = vpack.c.b16 %v1040, %v1039
        %v1072 = vpack.c.b16 %v1042, %v1041
        %v1073 = vpack.c.b16 %v1044, %v1043
        %v1074 = vpack.c.b16 %v1046, %v1045
        %v1075 = vpack.c.b16 %v1048, %v1047
        %v1076 = vpack.c.b16 %v1050, %v1049
        %v1077 = vpack.c.b16 %v1052, %v1051
        %v1078 = vpack.c.b16 %v1054, %v1053
        %1103 = vmatpush.bf16.msra.mxu0 %v1062
        %1104 = vmatpush.bf16.msra.mxu0 %v1061
        %1105 = vmatpush.bf16.msra.mxu0 %v1060
        %1106 = vmatpush.bf16.msra.mxu0 %v1059
        %1107 = vmatpush.bf16.msra.mxu0 %v1058
        %1108 = vmatpush.bf16.msra.mxu0 %v1057
        %1109 = vmatpush.bf16.msra.mxu0 %v1056
        %1110 = vmatpush.bf16.msra.mxu0 %v1055
        %1111 = vmatmul.bf16.gmra.mxu0 %v349
        %v1112 = vpop.f32.mrf.mxu0
        %v1113 = vadd.f32 %v920, %v1112
        %v1114 = vpop.f32.mrf.mxu0
        %v1115 = vadd.f32 %v922, %v1114
        %1116 = vmatmul.bf16.gmra.mxu0 %v350
        %v1117 = vpop.f32.mrf.mxu0
        %v1118 = vadd.f32 %v925, %v1117
        %v1119 = vpop.f32.mrf.mxu0
        %v1120 = vadd.f32 %v927, %v1119
        %1121 = vmatmul.bf16.gmra.mxu0 %v351
        %v1122 = vpop.f32.mrf.mxu0
        %v1123 = vadd.f32 %v930, %v1122
        %v1124 = vpop.f32.mrf.mxu0
        %v1125 = vadd.f32 %v932, %v1124
        %1126 = vmatmul.bf16.gmra.mxu0 %v352
        %v1127 = vpop.f32.mrf.mxu0
        %v1128 = vadd.f32 %v935, %v1127
        %v1129 = vpop.f32.mrf.mxu0
        %v1130 = vadd.f32 %v937, %v1129
        %1131 = vmatmul.bf16.gmra.mxu0 %v353
        %v1132 = vpop.f32.mrf.mxu0
        %v1133 = vadd.f32 %v940, %v1132
        %v1134 = vpop.f32.mrf.mxu0
        %v1135 = vadd.f32 %v942, %v1134
        %1136 = vmatmul.bf16.gmra.mxu0 %v354
        %v1137 = vpop.f32.mrf.mxu0
        %v1138 = vadd.f32 %v945, %v1137
        %v1139 = vpop.f32.mrf.mxu0
        %v1140 = vadd.f32 %v947, %v1139
        %1141 = vmatmul.bf16.gmra.mxu0 %v355
        %v1142 = vpop.f32.mrf.mxu0
        %v1143 = vadd.f32 %v950, %v1142
        %v1144 = vpop.f32.mrf.mxu0
        %v1145 = vadd.f32 %v952, %v1144
        %1146 = vmatmul.bf16.gmra.mxu0 %v356
        %v1147 = vpop.f32.mrf.mxu0
        %v1148 = vadd.f32 %v955, %v1147
        %v1149 = vpop.f32.mrf.mxu0
        %v1150 = vadd.f32 %v957, %v1149
        %1151 = vdwg.mxu0
        %1152 = vmatpush.bf16.msra.mxu0 %v1070
        %1153 = vmatpush.bf16.msra.mxu0 %v1069
        %1154 = vmatpush.bf16.msra.mxu0 %v1068
        %1155 = vmatpush.bf16.msra.mxu0 %v1067
        %1156 = vmatpush.bf16.msra.mxu0 %v1066
        %1157 = vmatpush.bf16.msra.mxu0 %v1065
        %1158 = vmatpush.bf16.msra.mxu0 %v1064
        %1159 = vmatpush.bf16.msra.mxu0 %v1063
        %1160 = vmatmul.bf16.gmra.mxu0 %v411
        %v1161 = vpop.f32.mrf.mxu0
        %v1162 = vadd.f32 %v1113, %v1161
        %v1163 = vpop.f32.mrf.mxu0
        %v1164 = vadd.f32 %v1115, %v1163
        %1165 = vmatmul.bf16.gmra.mxu0 %v423
        %v1166 = vpop.f32.mrf.mxu0
        %v1167 = vadd.f32 %v1118, %v1166
        %v1168 = vpop.f32.mrf.mxu0
        %v1169 = vadd.f32 %v1120, %v1168
        %1170 = vmatmul.bf16.gmra.mxu0 %v435
        %v1171 = vpop.f32.mrf.mxu0
        %v1172 = vadd.f32 %v1123, %v1171
        %v1173 = vpop.f32.mrf.mxu0
        %v1174 = vadd.f32 %v1125, %v1173
        %1175 = vmatmul.bf16.gmra.mxu0 %v447
        %v1176 = vpop.f32.mrf.mxu0
        %v1177 = vadd.f32 %v1128, %v1176
        %v1178 = vpop.f32.mrf.mxu0
        %v1179 = vadd.f32 %v1130, %v1178
        %1180 = vmatmul.bf16.gmra.mxu0 %v459
        %v1181 = vpop.f32.mrf.mxu0
        %v1182 = vadd.f32 %v1133, %v1181
        %v1183 = vpop.f32.mrf.mxu0
        %v1184 = vadd.f32 %v1135, %v1183
        %1185 = vmatmul.bf16.gmra.mxu0 %v471
        %v1186 = vpop.f32.mrf.mxu0
        %v1187 = vadd.f32 %v1138, %v1186
        %v1188 = vpop.f32.mrf.mxu0
        %v1189 = vadd.f32 %v1140, %v1188
        %1190 = vmatmul.bf16.gmra.mxu0 %v483
        %v1191 = vpop.f32.mrf.mxu0
        %v1192 = vadd.f32 %v1143, %v1191
        %v1193 = vpop.f32.mrf.mxu0
        %v1194 = vadd.f32 %v1145, %v1193
        %1195 = vmatmul.bf16.gmra.mxu0 %v495
        %v1196 = vpop.f32.mrf.mxu0
        %v1197 = vadd.f32 %v1148, %v1196
        %v1198 = vpop.f32.mrf.mxu0
        %v1199 = vadd.f32 %v1150, %v1198
        %1200 = vdwg.mxu0
        %1201 = vmatpush.bf16.msra.mxu0 %v1078
        %1202 = vmatpush.bf16.msra.mxu0 %v1077
        %1203 = vmatpush.bf16.msra.mxu0 %v1076
        %1204 = vmatpush.bf16.msra.mxu0 %v1075
        %1205 = vmatpush.bf16.msra.mxu0 %v1074
        %1206 = vmatpush.bf16.msra.mxu0 %v1073
        %1207 = vmatpush.bf16.msra.mxu0 %v1072
        %1208 = vmatpush.bf16.msra.mxu0 %v1071
        %1209 = vmatmul.bf16.gmra.mxu0 %v533
        %v1210 = vpop.f32.mrf.mxu0
        %v1211 = vadd.f32 %v1162, %v1210
        %v1212 = vpop.f32.mrf.mxu0
        %v1213 = vadd.f32 %v1164, %v1212
        %1214 = vmatmul.bf16.gmra.mxu0 %v536
        %v1215 = vpop.f32.mrf.mxu0
        %v1216 = vadd.f32 %v1167, %v1215
        %v1217 = vpop.f32.mrf.mxu0
        %v1218 = vadd.f32 %v1169, %v1217
        %1219 = vmatmul.bf16.gmra.mxu0 %v539
        %v1220 = vpop.f32.mrf.mxu0
        %v1221 = vadd.f32 %v1172, %v1220
        %v1222 = vpop.f32.mrf.mxu0
        %v1223 = vadd.f32 %v1174, %v1222
        %1224 = vmatmul.bf16.gmra.mxu0 %v542
        %v1225 = vpop.f32.mrf.mxu0
        %v1226 = vadd.f32 %v1177, %v1225
        %v1227 = vpop.f32.mrf.mxu0
        %v1228 = vadd.f32 %v1179, %v1227
        %1229 = vmatmul.bf16.gmra.mxu0 %v545
        %v1230 = vpop.f32.mrf.mxu0
        %v1231 = vadd.f32 %v1182, %v1230
        %v1232 = vpop.f32.mrf.mxu0
        %v1233 = vadd.f32 %v1184, %v1232
        %1234 = vmatmul.bf16.gmra.mxu0 %v548
        %v1235 = vpop.f32.mrf.mxu0
        %v1236 = vadd.f32 %v1187, %v1235
        %v1237 = vpop.f32.mrf.mxu0
        %v1238 = vadd.f32 %v1189, %v1237
        %1239 = vmatmul.bf16.gmra.mxu0 %v551
        %v1240 = vpop.f32.mrf.mxu0
        %v1241 = vadd.f32 %v1192, %v1240
        %v1242 = vpop.f32.mrf.mxu0
        %v1243 = vadd.f32 %v1194, %v1242
        %1244 = vmatmul.bf16.gmra.mxu0 %v554
        %v1245 = vpop.f32.mrf.mxu0
        %v1246 = vadd.f32 %v1197, %v1245
        %v1247 = vpop.f32.mrf.mxu0
        %v1248 = vadd.f32 %v1199, %v1247
        %1249 = vdwg.mxu0
        %s1250 = scalar_lea.vmem %s271, 384
        %v1251 = vld [vmem:[%s1250] sm:$0xf]
        %v1252 = vld [vmem:[%s1250 + $0x4] sm:$0xf]
        %v1253 = vld [vmem:[%s1250 + $0x8] sm:$0xf]
        %v1254 = vld [vmem:[%s1250 + $0xc] sm:$0xf]
        %v1255 = vld [vmem:[%s1250 + $0x10] sm:$0xf]
        %v1256 = vld [vmem:[%s1250 + $0x14] sm:$0xf]
        %v1257 = vld [vmem:[%s1250 + $0x18] sm:$0xf]
        %v1258 = vld [vmem:[%s1250 + $0x1c] sm:$0xf]
        %v1259 = vld [vmem:[%s1250 + $0x20] sm:$0xf]
        %v1260 = vld [vmem:[%s1250 + $0x24] sm:$0xf]
        %v1261 = vld [vmem:[%s1250 + $0x28] sm:$0xf]
        %v1262 = vld [vmem:[%s1250 + $0x2c] sm:$0xf]
        %v1263 = vld [vmem:[%s1250 + $0x30] sm:$0xf]
        %v1264 = vld [vmem:[%s1250 + $0x34] sm:$0xf]
        %v1265 = vld [vmem:[%s1250 + $0x38] sm:$0xf]
        %v1266 = vld [vmem:[%s1250 + $0x3c] sm:$0xf]
        %v1267 = vld [vmem:[%s1250 + $0x40] sm:$0xf]
        %v1268 = vld [vmem:[%s1250 + $0x44] sm:$0xf]
        %v1269 = vld [vmem:[%s1250 + $0x48] sm:$0xf]
        %v1270 = vld [vmem:[%s1250 + $0x4c] sm:$0xf]
        %v1271 = vld [vmem:[%s1250 + $0x50] sm:$0xf]
        %v1272 = vld [vmem:[%s1250 + $0x54] sm:$0xf]
        %v1273 = vld [vmem:[%s1250 + $0x58] sm:$0xf]
        %v1274 = vld [vmem:[%s1250 + $0x5c] sm:$0xf]
        %v1275 = vld [vmem:[%s1250 + $0x60] sm:$0xf]
        %v1276 = vld [vmem:[%s1250 + $0x64] sm:$0xf]
        %v1277 = vld [vmem:[%s1250 + $0x68] sm:$0xf]
        %v1278 = vld [vmem:[%s1250 + $0x6c] sm:$0xf]
        %v1279 = vld [vmem:[%s1250 + $0x70] sm:$0xf]
        %v1280 = vld [vmem:[%s1250 + $0x74] sm:$0xf]
        %v1281 = vld [vmem:[%s1250 + $0x78] sm:$0xf]
        %v1282 = vld [vmem:[%s1250 + $0x7c] sm:$0xf]
        %v1283 = vld [vmem:[%s1250 + $0x80] sm:$0xf]
        %v1284 = vld [vmem:[%s1250 + $0x84] sm:$0xf]
        %v1285 = vld [vmem:[%s1250 + $0x88] sm:$0xf]
        %v1286 = vld [vmem:[%s1250 + $0x8c] sm:$0xf]
        %v1287 = vld [vmem:[%s1250 + $0x90] sm:$0xf]
        %v1288 = vld [vmem:[%s1250 + $0x94] sm:$0xf]
        %v1289 = vld [vmem:[%s1250 + $0x98] sm:$0xf]
        %v1290 = vld [vmem:[%s1250 + $0x9c] sm:$0xf]
        %v1291 = vld [vmem:[%s1250 + $0xa0] sm:$0xf]
        %v1292 = vld [vmem:[%s1250 + $0xa4] sm:$0xf]
        %v1293 = vld [vmem:[%s1250 + $0xa8] sm:$0xf]
        %v1294 = vld [vmem:[%s1250 + $0xac] sm:$0xf]
        %v1295 = vld [vmem:[%s1250 + $0xb0] sm:$0xf]
        %v1296 = vld [vmem:[%s1250 + $0xb4] sm:$0xf]
        %v1297 = vld [vmem:[%s1250 + $0xb8] sm:$0xf]
        %v1298 = vld [vmem:[%s1250 + $0xbc] sm:$0xf]
        %v1347 = vunpack.c.l.b16 %v1251
        %v1348 = vunpack.c.l.b16 %v1252
        %v1349 = vunpack.c.l.b16 %v1253
        %v1350 = vunpack.c.l.b16 %v1254
        %v1351 = vunpack.c.l.b16 %v1255
        %v1352 = vunpack.c.l.b16 %v1256
        %v1353 = vunpack.c.l.b16 %v1257
        %v1354 = vunpack.c.l.b16 %v1258
        %v1355 = vunpack.c.l.b16 %v1259
        %v1356 = vunpack.c.l.b16 %v1260
        %v1357 = vunpack.c.l.b16 %v1261
        %v1358 = vunpack.c.l.b16 %v1262
        %v1359 = vunpack.c.l.b16 %v1263
        %v1360 = vunpack.c.l.b16 %v1264
        %v1361 = vunpack.c.l.b16 %v1265
        %v1362 = vunpack.c.l.b16 %v1266
        %v1363 = vunpack.c.l.b16 %v1267
        %v1364 = vunpack.c.l.b16 %v1268
        %v1365 = vunpack.c.l.b16 %v1269
        %v1366 = vunpack.c.l.b16 %v1270
        %v1367 = vunpack.c.l.b16 %v1271
        %v1368 = vunpack.c.l.b16 %v1272
        %v1369 = vunpack.c.l.b16 %v1273
        %v1370 = vunpack.c.l.b16 %v1274
        %v1371 = vunpack.c.l.b16 %v1275
        %v1372 = vunpack.c.l.b16 %v1276
        %v1373 = vunpack.c.l.b16 %v1277
        %v1374 = vunpack.c.l.b16 %v1278
        %v1375 = vunpack.c.l.b16 %v1279
        %v1376 = vunpack.c.l.b16 %v1280
        %v1377 = vunpack.c.l.b16 %v1281
        %v1378 = vunpack.c.l.b16 %v1282
        %v1379 = vunpack.c.l.b16 %v1283
        %v1380 = vunpack.c.l.b16 %v1284
        %v1381 = vunpack.c.l.b16 %v1285
        %v1382 = vunpack.c.l.b16 %v1286
        %v1383 = vunpack.c.l.b16 %v1287
        %v1384 = vunpack.c.l.b16 %v1288
        %v1385 = vunpack.c.l.b16 %v1289
        %v1386 = vunpack.c.l.b16 %v1290
        %v1387 = vunpack.c.l.b16 %v1291
        %v1388 = vunpack.c.l.b16 %v1292
        %v1389 = vunpack.c.l.b16 %v1293
        %v1390 = vunpack.c.l.b16 %v1294
        %v1391 = vunpack.c.l.b16 %v1295
        %v1392 = vunpack.c.l.b16 %v1296
        %v1393 = vunpack.c.l.b16 %v1297
        %v1394 = vunpack.c.l.b16 %v1298
        %v1395 = vpack.c.b16 %v1348, %v1347
        %v1396 = vpack.c.b16 %v1350, %v1349
        %v1397 = vpack.c.b16 %v1352, %v1351
        %v1398 = vpack.c.b16 %v1354, %v1353
        %v1399 = vpack.c.b16 %v1356, %v1355
        %v1400 = vpack.c.b16 %v1358, %v1357
        %v1401 = vpack.c.b16 %v1360, %v1359
        %v1402 = vpack.c.b16 %v1362, %v1361
        %v1403 = vpack.c.b16 %v1364, %v1363
        %v1404 = vpack.c.b16 %v1366, %v1365
        %v1405 = vpack.c.b16 %v1368, %v1367
        %v1406 = vpack.c.b16 %v1370, %v1369
        %v1407 = vpack.c.b16 %v1372, %v1371
        %v1408 = vpack.c.b16 %v1374, %v1373
        %v1409 = vpack.c.b16 %v1376, %v1375
        %v1410 = vpack.c.b16 %v1378, %v1377
        %v1411 = vpack.c.b16 %v1380, %v1379
        %v1412 = vpack.c.b16 %v1382, %v1381
        %v1413 = vpack.c.b16 %v1384, %v1383
        %v1414 = vpack.c.b16 %v1386, %v1385
        %v1415 = vpack.c.b16 %v1388, %v1387
        %v1416 = vpack.c.b16 %v1390, %v1389
        %v1417 = vpack.c.b16 %v1392, %v1391
        %v1418 = vpack.c.b16 %v1394, %v1393
        %1443 = vmatpush.bf16.msra.mxu0 %v1402
        %1444 = vmatpush.bf16.msra.mxu0 %v1401
        %1445 = vmatpush.bf16.msra.mxu0 %v1400
        %1446 = vmatpush.bf16.msra.mxu0 %v1399
        %1447 = vmatpush.bf16.msra.mxu0 %v1398
        %1448 = vmatpush.bf16.msra.mxu0 %v1397
        %1449 = vmatpush.bf16.msra.mxu0 %v1396
        %1450 = vmatpush.bf16.msra.mxu0 %v1395
        %1451 = vmatmul.bf16.gmra.mxu0 %v351
        %v1452 = vpop.f32.mrf.mxu0
        %v1453 = vadd.f32 0.0, %v1452
        %v1454 = vpop.f32.mrf.mxu0
        %v1455 = vadd.f32 0.0, %v1454
        %1456 = vmatmul.bf16.gmra.mxu0 %v352
        %v1457 = vpop.f32.mrf.mxu0
        %v1458 = vadd.f32 0.0, %v1457
        %v1459 = vpop.f32.mrf.mxu0
        %v1460 = vadd.f32 0.0, %v1459
        %1461 = vmatmul.bf16.gmra.mxu0 %v353
        %v1462 = vpop.f32.mrf.mxu0
        %v1463 = vadd.f32 0.0, %v1462
        %v1464 = vpop.f32.mrf.mxu0
        %v1465 = vadd.f32 0.0, %v1464
        %1466 = vmatmul.bf16.gmra.mxu0 %v354
        %v1467 = vpop.f32.mrf.mxu0
        %v1468 = vadd.f32 0.0, %v1467
        %v1469 = vpop.f32.mrf.mxu0
        %v1470 = vadd.f32 0.0, %v1469
        %1471 = vmatmul.bf16.gmra.mxu0 %v355
        %v1472 = vpop.f32.mrf.mxu0
        %v1473 = vadd.f32 0.0, %v1472
        %v1474 = vpop.f32.mrf.mxu0
        %v1475 = vadd.f32 0.0, %v1474
        %1476 = vmatmul.bf16.gmra.mxu0 %v356
        %v1477 = vpop.f32.mrf.mxu0
        %v1478 = vadd.f32 0.0, %v1477
        %v1479 = vpop.f32.mrf.mxu0
        %v1480 = vadd.f32 0.0, %v1479
        %1481 = vmatmul.bf16.gmra.mxu0 %v357
        %v1482 = vpop.f32.mrf.mxu0
        %v1483 = vadd.f32 0.0, %v1482
        %v1484 = vpop.f32.mrf.mxu0
        %v1485 = vadd.f32 0.0, %v1484
        %1486 = vmatmul.bf16.gmra.mxu0 %v358
        %v1487 = vpop.f32.mrf.mxu0
        %v1488 = vadd.f32 0.0, %v1487
        %v1489 = vpop.f32.mrf.mxu0
        %v1490 = vadd.f32 0.0, %v1489
        %1491 = vdwg.mxu0
        %1492 = vmatpush.bf16.msra.mxu0 %v1410
        %1493 = vmatpush.bf16.msra.mxu0 %v1409
        %1494 = vmatpush.bf16.msra.mxu0 %v1408
        %1495 = vmatpush.bf16.msra.mxu0 %v1407
        %1496 = vmatpush.bf16.msra.mxu0 %v1406
        %1497 = vmatpush.bf16.msra.mxu0 %v1405
        %1498 = vmatpush.bf16.msra.mxu0 %v1404
        %1499 = vmatpush.bf16.msra.mxu0 %v1403
        %1500 = vmatmul.bf16.gmra.mxu0 %v435
        %v1501 = vpop.f32.mrf.mxu0
        %v1502 = vadd.f32 %v1453, %v1501
        %v1503 = vpop.f32.mrf.mxu0
        %v1504 = vadd.f32 %v1455, %v1503
        %1505 = vmatmul.bf16.gmra.mxu0 %v447
        %v1506 = vpop.f32.mrf.mxu0
        %v1507 = vadd.f32 %v1458, %v1506
        %v1508 = vpop.f32.mrf.mxu0
        %v1509 = vadd.f32 %v1460, %v1508
        %1510 = vmatmul.bf16.gmra.mxu0 %v459
        %v1511 = vpop.f32.mrf.mxu0
        %v1512 = vadd.f32 %v1463, %v1511
        %v1513 = vpop.f32.mrf.mxu0
        %v1514 = vadd.f32 %v1465, %v1513
        %1515 = vmatmul.bf16.gmra.mxu0 %v471
        %v1516 = vpop.f32.mrf.mxu0
        %v1517 = vadd.f32 %v1468, %v1516
        %v1518 = vpop.f32.mrf.mxu0
        %v1519 = vadd.f32 %v1470, %v1518
        %1520 = vmatmul.bf16.gmra.mxu0 %v483
        %v1521 = vpop.f32.mrf.mxu0
        %v1522 = vadd.f32 %v1473, %v1521
        %v1523 = vpop.f32.mrf.mxu0
        %v1524 = vadd.f32 %v1475, %v1523
        %1525 = vmatmul.bf16.gmra.mxu0 %v495
        %v1526 = vpop.f32.mrf.mxu0
        %v1527 = vadd.f32 %v1478, %v1526
        %v1528 = vpop.f32.mrf.mxu0
        %v1529 = vadd.f32 %v1480, %v1528
        %1530 = vmatmul.bf16.gmra.mxu0 %v507
        %v1531 = vpop.f32.mrf.mxu0
        %v1532 = vadd.f32 %v1483, %v1531
        %v1533 = vpop.f32.mrf.mxu0
        %v1534 = vadd.f32 %v1485, %v1533
        %1535 = vmatmul.bf16.gmra.mxu0 %v519
        %v1536 = vpop.f32.mrf.mxu0
        %v1537 = vadd.f32 %v1488, %v1536
        %v1538 = vpop.f32.mrf.mxu0
        %v1539 = vadd.f32 %v1490, %v1538
        %1540 = vdwg.mxu0
        %1541 = vmatpush.bf16.msra.mxu0 %v1418
        %1542 = vmatpush.bf16.msra.mxu0 %v1417
        %1543 = vmatpush.bf16.msra.mxu0 %v1416
        %1544 = vmatpush.bf16.msra.mxu0 %v1415
        %1545 = vmatpush.bf16.msra.mxu0 %v1414
        %1546 = vmatpush.bf16.msra.mxu0 %v1413
        %1547 = vmatpush.bf16.msra.mxu0 %v1412
        %1548 = vmatpush.bf16.msra.mxu0 %v1411
        %1549 = vmatmul.bf16.gmra.mxu0 %v539
        %v1550 = vpop.f32.mrf.mxu0
        %v1551 = vadd.f32 %v1502, %v1550
        %v1552 = vpop.f32.mrf.mxu0
        %v1553 = vadd.f32 %v1504, %v1552
        %1554 = vmatmul.bf16.gmra.mxu0 %v542
        %v1555 = vpop.f32.mrf.mxu0
        %v1556 = vadd.f32 %v1507, %v1555
        %v1557 = vpop.f32.mrf.mxu0
        %v1558 = vadd.f32 %v1509, %v1557
        %1559 = vmatmul.bf16.gmra.mxu0 %v545
        %v1560 = vpop.f32.mrf.mxu0
        %v1561 = vadd.f32 %v1512, %v1560
        %v1562 = vpop.f32.mrf.mxu0
        %v1563 = vadd.f32 %v1514, %v1562
        %1564 = vmatmul.bf16.gmra.mxu0 %v548
        %v1565 = vpop.f32.mrf.mxu0
        %v1566 = vadd.f32 %v1517, %v1565
        %v1567 = vpop.f32.mrf.mxu0
        %v1568 = vadd.f32 %v1519, %v1567
        %1569 = vmatmul.bf16.gmra.mxu0 %v551
        %v1570 = vpop.f32.mrf.mxu0
        %v1571 = vadd.f32 %v1522, %v1570
        %v1572 = vpop.f32.mrf.mxu0
        %v1573 = vadd.f32 %v1524, %v1572
        %1574 = vmatmul.bf16.gmra.mxu0 %v554
        %v1575 = vpop.f32.mrf.mxu0
        %v1576 = vadd.f32 %v1527, %v1575
        %v1577 = vpop.f32.mrf.mxu0
        %v1578 = vadd.f32 %v1529, %v1577
        %1579 = vmatmul.bf16.gmra.mxu0 %v557
        %v1580 = vpop.f32.mrf.mxu0
        %v1581 = vadd.f32 %v1532, %v1580
        %v1582 = vpop.f32.mrf.mxu0
        %v1583 = vadd.f32 %v1534, %v1582
        %1584 = vmatmul.bf16.gmra.mxu0 %v560
        %v1585 = vpop.f32.mrf.mxu0
        %v1586 = vadd.f32 %v1537, %v1585
        %v1587 = vpop.f32.mrf.mxu0
        %v1588 = vadd.f32 %v1539, %v1587
        %1589 = vdwg.mxu0
        %v1590 = vadd.f32 %v1211, %v1551
        %v1591 = vadd.f32 %v1213, %v1553
        %v1592 = vadd.f32 %v1216, %v1556
        %v1593 = vadd.f32 %v1218, %v1558
        %v1594 = vadd.f32 %v1221, %v1561
        %v1595 = vadd.f32 %v1223, %v1563
        %v1596 = vadd.f32 %v1226, %v1566
        %v1597 = vadd.f32 %v1228, %v1568
        %v1598 = vadd.f32 %v1231, %v1571
        %v1599 = vadd.f32 %v1233, %v1573
        %v1600 = vadd.f32 %v1236, %v1576
        %v1601 = vadd.f32 %v1238, %v1578
        %v1602 = vadd.f32 %v1241, %v1581
        %v1603 = vadd.f32 %v1243, %v1583
        %v1604 = vadd.f32 %v1246, %v1586
        %v1605 = vadd.f32 %v1248, %v1588
        %v1606 = vld [vmem:[%s274] sm:$0x1]
        %v1608 = vperm.slane %v1606, 0
        %v1610 = vmul.f32 %v1590, %v1608
        %v1611 = vmul.f32 %v1591, %v1608
        %v1612 = vmul.f32 %v1592, %v1608
        %v1613 = vmul.f32 %v1593, %v1608
        %v1614 = vmul.f32 %v1594, %v1608
        %v1615 = vmul.f32 %v1595, %v1608
        %v1616 = vmul.f32 %v1596, %v1608
        %v1617 = vmul.f32 %v1597, %v1608
        %v1618 = vmul.f32 %v1598, %v1608
        %v1619 = vmul.f32 %v1599, %v1608
        %v1620 = vmul.f32 %v1600, %v1608
        %v1621 = vmul.f32 %v1601, %v1608
        %v1622 = vmul.f32 %v1602, %v1608
        %v1623 = vmul.f32 %v1603, %v1608
        %v1624 = vmul.f32 %v1604, %v1608
        %v1625 = vmul.f32 %v1605, %v1608
        %v1626 = vld [vmem:[%s277] sm:$0x1]
        %v1628 = vperm.slane %v1626, 0
        %v1630 = vadd.f32 %v1610, %v1628
        %v1631 = vadd.f32 %v1611, %v1628
        %v1632 = vadd.f32 %v1612, %v1628
        %v1633 = vadd.f32 %v1613, %v1628
        %v1634 = vadd.f32 %v1614, %v1628
        %v1635 = vadd.f32 %v1615, %v1628
        %v1636 = vadd.f32 %v1616, %v1628
        %v1637 = vadd.f32 %v1617, %v1628
        %v1638 = vadd.f32 %v1618, %v1628
        %v1639 = vadd.f32 %v1619, %v1628
        %v1640 = vadd.f32 %v1620, %v1628
        %v1641 = vadd.f32 %v1621, %v1628
        %v1642 = vadd.f32 %v1622, %v1628
        %v1643 = vadd.f32 %v1623, %v1628
        %v1644 = vadd.f32 %v1624, %v1628
        %v1645 = vadd.f32 %v1625, %v1628
        %v1646 = vmax.f32 %v1630, 0.0
        %v1647 = vmax.f32 %v1631, 0.0
        %v1648 = vmax.f32 %v1632, 0.0
        %v1649 = vmax.f32 %v1633, 0.0
        %v1650 = vmax.f32 %v1634, 0.0
        %v1651 = vmax.f32 %v1635, 0.0
        %v1652 = vmax.f32 %v1636, 0.0
        %v1653 = vmax.f32 %v1637, 0.0
        %v1654 = vmax.f32 %v1638, 0.0
        %v1655 = vmax.f32 %v1639, 0.0
        %v1656 = vmax.f32 %v1640, 0.0
        %v1657 = vmax.f32 %v1641, 0.0
        %v1658 = vmax.f32 %v1642, 0.0
        %v1659 = vmax.f32 %v1643, 0.0
        %v1660 = vmax.f32 %v1644, 0.0
        %v1661 = vmax.f32 %v1645, 0.0
        %v1662 = vmin.f32 %v1646, 6.0
        %v1663 = vmin.f32 %v1647, 6.0
        %v1664 = vmin.f32 %v1648, 6.0
        %v1665 = vmin.f32 %v1649, 6.0
        %v1666 = vmin.f32 %v1650, 6.0
        %v1667 = vmin.f32 %v1651, 6.0
        %v1668 = vmin.f32 %v1652, 6.0
        %v1669 = vmin.f32 %v1653, 6.0
        %v1670 = vmin.f32 %v1654, 6.0
        %v1671 = vmin.f32 %v1655, 6.0
        %v1672 = vmin.f32 %v1656, 6.0
        %v1673 = vmin.f32 %v1657, 6.0
        %v1674 = vmin.f32 %v1658, 6.0
        %v1675 = vmin.f32 %v1659, 6.0
        %v1676 = vmin.f32 %v1660, 6.0
        %v1677 = vmin.f32 %v1661, 6.0
        %1678 = vst [vmem:[%s258] sm:$0xff] %v1662
        %1679 = vst [vmem:[%s258 + $0x8] sm:$0xff] %v1663
        %1680 = vst [vmem:[%s258 + $0x10] sm:$0xff] %v1664
        %1681 = vst [vmem:[%s258 + $0x18] sm:$0xff] %v1665
        %1682 = vst [vmem:[%s258 + $0x20] sm:$0xff] %v1666
        %1683 = vst [vmem:[%s258 + $0x28] sm:$0xff] %v1667
        %1684 = vst [vmem:[%s258 + $0x30] sm:$0xff] %v1668
        %1685 = vst [vmem:[%s258 + $0x38] sm:$0xff] %v1669
        %1686 = vst [vmem:[%s258 + $0x40] sm:$0xff] %v1670
        %1687 = vst [vmem:[%s258 + $0x48] sm:$0xff] %v1671
        %1688 = vst [vmem:[%s258 + $0x50] sm:$0xff] %v1672
        %1689 = vst [vmem:[%s258 + $0x58] sm:$0xff] %v1673
        %1690 = vst [vmem:[%s258 + $0x60] sm:$0xff] %v1674
        %1691 = vst [vmem:[%s258 + $0x68] sm:$0xff] %v1675
        %1692 = vst [vmem:[%s258 + $0x70] sm:$0xff] %v1676
        %1693 = vst [vmem:[%s258 + $0x78] sm:$0xff] %v1677
        %s1694 = sand.u32 %s155, 1
        %s1695 = scalar_lea.sflag [#allocation3], %s1694
        %s1696 = sand.u32 %s155, 1
        %s1697 = smul.addr %s1696, 128
        %s1698 = scalar_lea.vmem [#allocation2], %s1697
        // Predicated region
        $region37: #{tpu_custom_call.1} parent=35 // pred_check
          %p1699 = pneg %p165
        $region38: #{tpu_custom_call.1} parent=35 // pred_check_branch
          %1701 = sbr.rel (%p1699) target = $region40
        $region39: #{tpu_custom_call.1} parent=35 // pred_region
          %s1702 = smul.u32 8, %s24
          %1704 = vsyncadd %s1695, 0
          %s1705 = smul.addr %s1702, 2
          %s1706 = sadd.s32 %s25, %s1705
          %s1707 = smul.addr %s23, 32
          %s1708 = sadd.s32 %s1706, %s1707
          %s1709 = smul.addr %s1708, 8
          %s1710 = scalar_lea.hbm %s4, %s1709
          %s1711 = sshll.u32 %s1698, 4
          %s1712 = int_to_ptr.vmem [resolvable:$true] %s1711
          %s1713 = sshll.u32 %s1710, 4
          %s1714 = int_to_ptr.hbm [resolvable:$true] %s1713
          %1719 = dma.vmem_to_hbm [thread:$0]  %s1712, 2048, %s1714, %s1695, 128, 128, 8
        $region40: #{tpu_custom_call.1} parent=35 // pred_fallthru
          _
      $region36: #{tpu_custom_call.1} parent=5 // pred_fallthru
        _
      %p1720 = scmp.le.s32.totalorder 2, %s13
      // Predicated region
      $region41: #{tpu_custom_call.1} parent=5 // pred_check
        %p1721 = pneg %p1720
      $region42: #{tpu_custom_call.1} parent=5 // pred_check_branch
        %1723 = sbr.rel (%p1721) target = $region44
      $region43: #{tpu_custom_call.1} parent=5 // pred_region
        %s1724 = ssub.s32 %s13, 2
        // Predicated region
        $region45: #{tpu_custom_call.1} parent=43 // pred_check
          %p1725 = pneg %p171
        $region46: #{tpu_custom_call.1} parent=43 // pred_check_branch
          %1727 = sbr.rel (%p1725) target = $region48
        $region47: #{tpu_custom_call.1} parent=43 // pred_region
          %s1728 = sand.u32 %s156, 1
          %s1729 = scalar_lea.sflag [#allocation3], %s1728
          %s1730 = sand.u32 %s156, 1
          %s1731 = smul.addr %s1730, 128
          %s1732 = scalar_lea.vmem [#allocation2], %s1731
          %1734 = dma.done %s1729, 2048
        $region48: #{tpu_custom_call.1} parent=43 // pred_fallthru
          _
      $region44: #{tpu_custom_call.1} parent=5 // pred_fallthru
        _
    $region6: #{tpu_custom_call.1} parent=1 // loop_footer
      %s17 = sadd.s32 1, %s13
    $region7: #{tpu_custom_call.1} parent=1 // loop_footer_branch
      %12 = sbr.rel target = $region3
    $region8: #{tpu_custom_call.1} parent=1 // loop_exit
      _
    %1735 = vsyncpa [#allocation3], 1
    %s1736 = scalar_lea.sflag [#allocation3], 1
    %1737 = vsyncpa %s1736, 1

</llo_original>
